<compile_context>
chip_gen: v7x
topology: tpu7x:2x2x1
jax: 0.10.0
libtpu: 0.0.40
codegen_flags: <defaults>
</compile_context>

<pallas_src>
import functools

import numpy as np
import jax
import jax.numpy as jnp
from jax import lax
from jax.experimental import pallas as pl
from jax.experimental.pallas import tpu as pltpu


def _round_up(x, m):
    return (x + m - 1) // m * m


def _act(x, act):
    if act is None:
        return x
    if act == "ReLU":
        return jnp.maximum(x, 0.0)
    if act == "LeakyReLU":
        return jnp.where(x >= 0, x, 0.05 * x)  # module uses negative_slope=0.05
    # TODO(synk): PReLU needs learned per-channel slopes; not wired here.
    raise ValueError(f"unsupported act: {act}")


def _mbl_kernel(x_ref, w1_ref, w2_ref, m_ref, o_ref, taps_ref, ysort_ref, *,
                K, C, W, HW, HWp, nb, act, res_mode, res_ratio):
    """Fused MultiBranchLayer forward for a block of `nb` images.

    x_ref:     (C, L)      activations, L = nb*HWp lanes (HWp = HW padded to 128)
    w1_ref:    (C, KK*C)   conv1 weights stacked tap-major / channel-minor
    w2_ref:    (C, KK*C)   grouped conv2 as block-diagonal dense, stacked likewise
    m_ref:     (KK, L)     per-tap validity masks (0/1 f32; also zero the pad tail)
    o_ref:     (C, L)
    taps_ref:  (KK*C, L)   VMEM scratch: stacked rolled+masked taps
    ysort_ref: (C, L)      VMEM scratch: channel-sorted conv1 output
    """
    KK = K * K
    P = (K - 1) // 2
    L = nb * HWp
    x = x_ref[...]                                            # (C, L)

    def conv(inp, w_ref):
        # Stage the K*K shifted taps in VMEM, then ONE MXU contraction of depth
        # KK*C (instead of KK tiny matmuls + a VPU add chain).  Tap shift is a
        # lane rotation (XLU); border / pad-tail / cross-image validity is a
        # select against the precomputed mask (so Inf/NaN at borders become
        # exact zeros, unlike a 0-multiply).
        for t in range(KK):                                   # static unroll
            s = (t // K - P) * W + (t % K - P)
            xs = inp if s == 0 else pltpu.roll(inp, shift=(-s) % L, axis=1)
            m = m_ref[pl.ds(t, 1), :]                         # (1, L)
            taps_ref[t * C:(t + 1) * C, :] = jnp.where(m > 0.0, xs, 0.0)
        return jnp.dot(w_ref[...], taps_ref[...],
                       preferred_element_type=jnp.float32)    # (C, L)

    # ---- conv1 + activation -------------------------------------------------
    y = _act(conv(x, w1_ref), act)

    # ---- per-image channel sort by descending spatial mean (stable ties) ----
    inv_hw = jnp.float32(1.0 / HW)
    ci = lax.broadcasted_iota(jnp.int32, (C, C), 0)           # output row p
    cj = lax.broadcasted_iota(jnp.int32, (C, C), 1)           # channel j
    ones_c1 = jnp.ones((C, 1), jnp.float32)
    for n in range(nb):                                       # static unroll
        seg = y[:, n * HWp:(n + 1) * HWp]                     # (C, HWp) 128-aligned
        mean_c = jnp.sum(seg, axis=1, keepdims=True) * inv_hw          # (C, 1)
        # Same mean values replicated along lanes via a K=1 outer product
        # (tiny MXU op; avoids a small-shape transpose relayout and keeps both
        # sides of the compare bit-identical so the ranking is a permutation).
        mean_r = lax.dot_general(ones_c1, mean_c, (((1,), (1,)), ((), ())),
                                 preferred_element_type=jnp.float32)   # mean[j]
        mean_col = jnp.broadcast_to(mean_c, (C, C))                    # mean[i]
        # ahead[i, j] = 1 iff channel i precedes channel j (stable descending).
        ahead = ((mean_col > mean_r) |
                 ((mean_col == mean_r) & (ci < cj))).astype(jnp.float32)
        rank = jnp.sum(ahead, axis=0, keepdims=True)                   # (1, C)
        perm = (jnp.broadcast_to(rank, (C, C)) ==
                ci.astype(jnp.float32)).astype(jnp.float32)            # perm[p, j]
        ysort_ref[:, n * HWp:(n + 1) * HWp] = jnp.dot(
            perm, seg, preferred_element_type=jnp.float32)

    # ---- grouped conv2 (block-diag weights) + activation + residual ---------
    z = _act(conv(ysort_ref[...], w2_ref), act)
    if res_mode:
        z = z + jnp.float32(res_ratio) * x                    # input already resident
    o_ref[...] = z


def _pick_batch_block(N, C, KK, HWp):
    """Images per grid step: amortize the ~0.35us/step overhead and widen the
    matmul lane extent, but keep >= 2 grid steps when N >= 2 (both v7x
    TensorCores get work) and stay far below v5e's 16 MiB scoped-VMEM default."""
    cp = _round_up(C, 8)
    per_img = 4 * HWp * (4 * cp                       # in + out, double buffered
                         + 2 * _round_up(KK, 8)       # mask block
                         + _round_up(KK * C, 8)       # tap scratch
                         + cp)                        # sort scratch
    nb = max(1, min(N, (8 * 1024 * 1024) // max(per_img, 1), 8))
    if N >= 2:
        nb = min(nb, max(1, N // 2))
    while N % nb:
        nb -= 1
    return nb


def multi_branch_layer(x_nchw, w1, w2, *, kernel_size, branch_num,
                       act=None, res_mode=False, res_ratio=1.0,
                       batch_block=None):
    """Pallas implementation of MultiBranchLayer.forward (NCHW in / NCHW out).

    w1: (C, C, K, K)               dense conv weight   (torch OIHW)
    w2: (C, C//branch_num, K, K)   grouped conv weight (torch OIHW)
    """
    # TODO(synk): conv bias not wired (module default bias=False).
    N, C, H, W = x_nchw.shape
    K, G = kernel_size, branch_num
    assert C % G == 0, "channels must be divisible by branch_num"
    P, Cg, KK = (K - 1) // 2, C // G, kernel_size * kernel_size
    HW = H * W
    HWp = _round_up(HW, 128)                          # lane-dense spatial axis
    nb = batch_block or _pick_batch_block(N, C, KK, HWp)
    L = nb * HWp

    # ---- activations: NCHW -> (C, N*HWp), images contiguous along lanes -----
    xf = x_nchw.reshape(N, C, HW).astype(jnp.float32)
    xf = jnp.pad(xf, ((0, 0), (0, 0), (0, HWp - HW)))
    x_kern = jnp.transpose(xf, (1, 0, 2)).reshape(C, N * HWp)

    # ---- conv1 weights stacked over taps: w1s[o, t*C + i] = w1[o,i,dy,dx] ----
    w1s = jnp.transpose(w1.astype(jnp.float32), (0, 2, 3, 1)).reshape(C, KK * C)

    # ---- grouped conv2 -> block-diagonal dense, stacked the same way --------
    w2d = jnp.zeros((C, C, K, K), jnp.float32)
    for g in range(G):
        w2d = w2d.at[g * Cg:(g + 1) * Cg, g * Cg:(g + 1) * Cg].set(
            w2[g * Cg:(g + 1) * Cg].astype(jnp.float32))
    w2s = jnp.transpose(w2d, (0, 2, 3, 1)).reshape(C, KK * C)

    # ---- compact per-tap validity masks over the (nb*HWp) lane axis ---------
    p = np.arange(HWp)
    hh, ww = p // W, p % W
    rows = []
    for dy in range(K):
        for dx in range(K):
            oy, ox = dy - P, dx - P
            rows.append((p < HW) & (hh + oy >= 0) & (hh + oy < H)
                        & (ww + ox >= 0) & (ww + ox < W))
    tap_mask = jnp.asarray(
        np.tile(np.stack(rows, 0).astype(np.float32), (1, nb)))   # (KK, L)

    # ---- explicit VMEM budget (sublane-padded working set, 4x headroom) -----
    cp, kkp, tp = _round_up(C, 8), _round_up(KK, 8), _round_up(KK * C, 8)
    need = 4 * (2 * cp * L + 2 * cp * L               # in / out blocks (x2 buffers)
                + 2 * kkp * L                         # mask block
                + 2 * 2 * cp * _round_up(KK * C, 128) # both stacked weights
                + tp * L + cp * L)                    # tap + sort scratch
    vmem_limit = int(min(max(4 * need, 8 << 20), 48 << 20))

    kernel = functools.partial(
        _mbl_kernel, K=K, C=C, W=W, HW=HW, HWp=HWp, nb=nb,
        act=act, res_mode=res_mode, res_ratio=res_ratio)

    out_kern = pl.pallas_call(
        kernel,
        out_shape=jax.ShapeDtypeStruct((C, N * HWp), jnp.float32),
        grid_spec=pltpu.PrefetchScalarGridSpec(
            num_scalar_prefetch=0,
            grid=(N // nb,),
            in_specs=[
                pl.BlockSpec((C, L), lambda b: (0, b)),
                # Weights / masks are grid-invariant (constant index_map):
                # Pallas does not re-DMA them across steps.  Double-buffer cost
                # here is a few KiB, so pipeline_mode=pl.Buffered(1) is skipped.
                pl.BlockSpec((C, KK * C), lambda b: (0, 0)),
                pl.BlockSpec((C, KK * C), lambda b: (0, 0)),
                pl.BlockSpec((KK, L), lambda b: (0, 0)),
            ],
            out_specs=pl.BlockSpec((C, L), lambda b: (0, b)),
            scratch_shapes=[
                pltpu.VMEM((KK * C, L), jnp.float32),   # stacked rolled taps
                pltpu.VMEM((C, L), jnp.float32),        # sorted conv1 output
            ],
        ),
        compiler_params=pltpu.CompilerParams(
            dimension_semantics=("parallel",),
            vmem_limit_bytes=vmem_limit),
    )(x_kern, w1s, w2s, tap_mask)

    # ---- (C, N*HWp) -> NCHW (drop lane padding) ------------------------------
    out = jnp.transpose(out_kern.reshape(C, N, HWp), (1, 0, 2))[..., :HW]
    return out.reshape(N, C, H, W)


# ------------------------- pure-JAX reference --------------------------------
def multi_branch_layer_ref(x, w1, w2, *, kernel_size, branch_num,
                           act=None, res_mode=False, res_ratio=1.0):
    P = (kernel_size - 1) // 2
    dn = ("NCHW", "OIHW", "NCHW")
    y = lax.conv_general_dilated(x, w1, (1, 1), [(P, P), (P, P)],
                                 dimension_numbers=dn)
    y = _act(y, act)
    means = jnp.mean(y, axis=(2, 3))
    idx = jnp.argsort(-means, axis=1)            # stable descending
    y = jnp.take_along_axis(y, idx[:, :, None, None], axis=1)
    z = lax.conv_general_dilated(y, w2, (1, 1), [(P, P), (P, P)],
                                 dimension_numbers=dn,
                                 feature_group_count=branch_num)
    z = _act(z, act)
    if res_mode:
        z = z + res_ratio * x
    return z


if __name__ == "__main__":
    key = jax.random.PRNGKey(0)
    keys = jax.random.split(key, 6)

    # --- Config A: MultiBranchLayer(4, 3, branch_num=2), defaults, N=2 ------
    N, C, H, W, K, G = 2, 4, 16, 16, 3, 2
    Cg = C // G
    x = jax.random.normal(keys[0], (N, C, H, W), jnp.float32)
    w1 = jax.random.normal(keys[1], (C, C, K, K), jnp.float32) / np.sqrt(C * K * K)
    w2 = jax.random.normal(keys[2], (C, Cg, K, K), jnp.float32) / np.sqrt(Cg * K * K)

    out = jax.block_until_ready(
        multi_branch_layer(x, w1, w2, kernel_size=K, branch_num=G))
    ref = jax.block_until_ready(
        multi_branch_layer_ref(x, w1, w2, kernel_size=K, branch_num=G))
    np.testing.assert_allclose(np.asarray(out), np.asarray(ref),
                               rtol=2e-4, atol=2e-4)

    # --- Config B: N=4 (2 images folded per grid step), LeakyReLU + residual -
    xb = jax.random.normal(keys[3], (4, C, H, W), jnp.float32)
    out2 = jax.block_until_ready(
        multi_branch_layer(xb, w1, w2, kernel_size=K, branch_num=G,
                           act="LeakyReLU", res_mode=True, res_ratio=0.5))
    ref2 = jax.block_until_ready(
        multi_branch_layer_ref(xb, w1, w2, kernel_size=K, branch_num=G,
                               act="LeakyReLU", res_mode=True, res_ratio=0.5))
    np.testing.assert_allclose(np.asarray(out2), np.asarray(ref2),
                               rtol=2e-4, atol=2e-4)

    # --- Config C: odd batch, C=6, K=5, 3 branches, non-128-multiple H*W
    #     (exercises the lane-padding path), ReLU + residual -------------------
    N3, C3, H3, W3, K3, G3 = 3, 6, 10, 12, 5, 3
    Cg3 = C3 // G3
    x3 = jax.random.normal(keys[4], (N3, C3, H3, W3), jnp.float32)
    w13 = jax.random.normal(keys[5], (C3, C3, K3, K3), jnp.float32) / np.sqrt(C3 * K3 * K3)
    w23 = jax.random.normal(keys[0], (C3, Cg3, K3, K3), jnp.float32) / np.sqrt(Cg3 * K3 * K3)
    out3 = jax.block_until_ready(
        multi_branch_layer(x3, w13, w23, kernel_size=K3, branch_num=G3,
                           act="ReLU", res_mode=True, res_ratio=1.0))
    ref3 = jax.block_until_ready(
        multi_branch_layer_ref(x3, w13, w23, kernel_size=K3, branch_num=G3,
                               act="ReLU", res_mode=True, res_ratio=1.0))
    np.testing.assert_allclose(np.asarray(out3), np.asarray(ref3),
                               rtol=5e-4, atol=5e-4)

    print("KERNEL_OK")
</pallas_src>

<mosaic_0001>
module attributes {stable_mosaic.version = 11 : i64} {
  func.func @_mbl_kernel(%arg0: i32, %arg1: memref<4x256xf32, #tpu.memory_space<vmem>>, %arg2: memref<4x36xf32, #tpu.memory_space<vmem>>, %arg3: memref<4x36xf32, #tpu.memory_space<vmem>>, %arg4: memref<9x256xf32, #tpu.memory_space<vmem>>, %arg5: memref<4x256xf32, #tpu.memory_space<vmem>>, %arg6: memref<36x256xf32, #tpu.memory_space<vmem>>, %arg7: memref<4x256xf32, #tpu.memory_space<vmem>>) attributes {dimension_semantics = [#tpu.dimension_semantics<parallel>], iteration_bounds = array<i64: 2>, scalar_prefetch = 0 : i64, scratch_operands = 2 : i64, tpu.core_type = #tpu.core_type<tc>, window_params = [{transform_indices = @transform_0, window_bounds = array<i64: 4, 256>}, {pipeline_mode = #tpu.pipeline_mode<synchronous>, transform_indices = @transform_1, window_bounds = array<i64: 4, 36>}, {pipeline_mode = #tpu.pipeline_mode<synchronous>, transform_indices = @transform_2, window_bounds = array<i64: 4, 36>}, {pipeline_mode = #tpu.pipeline_mode<synchronous>, transform_indices = @transform_3, window_bounds = array<i64: 9, 256>}, {transform_indices = @transform_4, window_bounds = array<i64: 4, 256>}]} {
    %c0 = arith.constant 0 : index
    %c0_0 = arith.constant 0 : index
    %0 = vector.load %arg1[%c0, %c0_0] : memref<4x256xf32, #tpu.memory_space<vmem>>, vector<4x256xf32>
    %c17_i32 = arith.constant 17 : i32
    %1 = tpu.dynamic_rotate %0 by %c17_i32 dim 1 : vector<4x256xf32>, i32 -> vector<4x256xf32>
    %c0_1 = arith.constant 0 : index
    %c0_2 = arith.constant 0 : index
    %2 = vector.load %arg4[%c0_1, %c0_2] : memref<9x256xf32, #tpu.memory_space<vmem>>, vector<1x256xf32>
    %cst = arith.constant 0.000000e+00 : f32
    %3 = vector.broadcast %cst : f32 to vector<1x256xf32>
    %4 = arith.cmpf ogt, %2, %3 : vector<1x256xf32>
    %cst_3 = arith.constant 0.000000e+00 : f32
    %5 = vector.shape_cast %4 : vector<1x256xi1> to vector<1x256xi1>
    %6 = vector.broadcast %5 : vector<1x256xi1> to vector<4x256xi1>
    %7 = vector.broadcast %cst_3 : f32 to vector<4x256xf32>
    %8 = arith.select %6, %1, %7 : vector<4x256xi1>, vector<4x256xf32>
    %c0_4 = arith.constant 0 : index
    %c0_5 = arith.constant 0 : index
    %9 = vector.load %arg6[%c0_4, %c0_5] : memref<36x256xf32, #tpu.memory_space<vmem>>, vector<4x256xf32>
    tpu.vector_store %arg6[%c0_4, %c0_5], %8 {strides = array<i32>} : memref<36x256xf32, #tpu.memory_space<vmem>>, vector<4x256xf32>,
    %c16_i32 = arith.constant 16 : i32
    %10 = tpu.dynamic_rotate %0 by %c16_i32 dim 1 : vector<4x256xf32>, i32 -> vector<4x256xf32>
    %c1 = arith.constant 1 : index
    %c0_6 = arith.constant 0 : index
    %11 = vector.load %arg4[%c1, %c0_6] : memref<9x256xf32, #tpu.memory_space<vmem>>, vector<1x256xf32>
    %cst_7 = arith.constant 0.000000e+00 : f32
    %12 = vector.broadcast %cst_7 : f32 to vector<1x256xf32>
    %13 = arith.cmpf ogt, %11, %12 : vector<1x256xf32>
    %cst_8 = arith.constant 0.000000e+00 : f32
    %14 = vector.shape_cast %13 : vector<1x256xi1> to vector<1x256xi1>
    %15 = vector.broadcast %14 : vector<1x256xi1> to vector<4x256xi1>
    %16 = vector.broadcast %cst_8 : f32 to vector<4x256xf32>
    %17 = arith.select %15, %10, %16 : vector<4x256xi1>, vector<4x256xf32>
    %c4 = arith.constant 4 : index
    %c0_9 = arith.constant 0 : index
    %18 = vector.load %arg6[%c4, %c0_9] : memref<36x256xf32, #tpu.memory_space<vmem>>, vector<4x256xf32>
    tpu.vector_store %arg6[%c4, %c0_9], %17 {strides = array<i32>} : memref<36x256xf32, #tpu.memory_space<vmem>>, vector<4x256xf32>,
    %c15_i32 = arith.constant 15 : i32
    %19 = tpu.dynamic_rotate %0 by %c15_i32 dim 1 : vector<4x256xf32>, i32 -> vector<4x256xf32>
    %c2 = arith.constant 2 : index
    %c0_10 = arith.constant 0 : index
    %20 = vector.load %arg4[%c2, %c0_10] : memref<9x256xf32, #tpu.memory_space<vmem>>, vector<1x256xf32>
    %cst_11 = arith.constant 0.000000e+00 : f32
    %21 = vector.broadcast %cst_11 : f32 to vector<1x256xf32>
    %22 = arith.cmpf ogt, %20, %21 : vector<1x256xf32>
    %cst_12 = arith.constant 0.000000e+00 : f32
    %23 = vector.shape_cast %22 : vector<1x256xi1> to vector<1x256xi1>
    %24 = vector.broadcast %23 : vector<1x256xi1> to vector<4x256xi1>
    %25 = vector.broadcast %cst_12 : f32 to vector<4x256xf32>
    %26 = arith.select %24, %19, %25 : vector<4x256xi1>, vector<4x256xf32>
    %c8 = arith.constant 8 : index
    %c0_13 = arith.constant 0 : index
    %27 = vector.load %arg6[%c8, %c0_13] : memref<36x256xf32, #tpu.memory_space<vmem>>, vector<4x256xf32>
    tpu.vector_store %arg6[%c8, %c0_13], %26 {strides = array<i32>} : memref<36x256xf32, #tpu.memory_space<vmem>>, vector<4x256xf32>,
    %c1_i32 = arith.constant 1 : i32
    %28 = tpu.dynamic_rotate %0 by %c1_i32 dim 1 : vector<4x256xf32>, i32 -> vector<4x256xf32>
    %c3 = arith.constant 3 : index
    %c0_14 = arith.constant 0 : index
    %29 = vector.load %arg4[%c3, %c0_14] : memref<9x256xf32, #tpu.memory_space<vmem>>, vector<1x256xf32>
    %cst_15 = arith.constant 0.000000e+00 : f32
    %30 = vector.broadcast %cst_15 : f32 to vector<1x256xf32>
    %31 = arith.cmpf ogt, %29, %30 : vector<1x256xf32>
    %cst_16 = arith.constant 0.000000e+00 : f32
    %32 = vector.shape_cast %31 : vector<1x256xi1> to vector<1x256xi1>
    %33 = vector.broadcast %32 : vector<1x256xi1> to vector<4x256xi1>
    %34 = vector.broadcast %cst_16 : f32 to vector<4x256xf32>
    %35 = arith.select %33, %28, %34 : vector<4x256xi1>, vector<4x256xf32>
    %c12 = arith.constant 12 : index
    %c0_17 = arith.constant 0 : index
    %36 = vector.load %arg6[%c12, %c0_17] : memref<36x256xf32, #tpu.memory_space<vmem>>, vector<4x256xf32>
    tpu.vector_store %arg6[%c12, %c0_17], %35 {strides = array<i32>} : memref<36x256xf32, #tpu.memory_space<vmem>>, vector<4x256xf32>,
    %c4_18 = arith.constant 4 : index
    %c0_19 = arith.constant 0 : index
    %37 = vector.load %arg4[%c4_18, %c0_19] : memref<9x256xf32, #tpu.memory_space<vmem>>, vector<1x256xf32>
    %cst_20 = arith.constant 0.000000e+00 : f32
    %38 = vector.broadcast %cst_20 : f32 to vector<1x256xf32>
    %39 = arith.cmpf ogt, %37, %38 : vector<1x256xf32>
    %cst_21 = arith.constant 0.000000e+00 : f32
    %40 = vector.shape_cast %39 : vector<1x256xi1> to vector<1x256xi1>
    %41 = vector.broadcast %40 : vector<1x256xi1> to vector<4x256xi1>
    %42 = vector.broadcast %cst_21 : f32 to vector<4x256xf32>
    %43 = arith.select %41, %0, %42 : vector<4x256xi1>, vector<4x256xf32>
    %c16 = arith.constant 16 : index
    %c0_22 = arith.constant 0 : index
    %44 = vector.load %arg6[%c16, %c0_22] : memref<36x256xf32, #tpu.memory_space<vmem>>, vector<4x256xf32>
    tpu.vector_store %arg6[%c16, %c0_22], %43 {strides = array<i32>} : memref<36x256xf32, #tpu.memory_space<vmem>>, vector<4x256xf32>,
    %c255_i32 = arith.constant 255 : i32
    %45 = tpu.dynamic_rotate %0 by %c255_i32 dim 1 : vector<4x256xf32>, i32 -> vector<4x256xf32>
    %c5 = arith.constant 5 : index
    %c0_23 = arith.constant 0 : index
    %46 = vector.load %arg4[%c5, %c0_23] : memref<9x256xf32, #tpu.memory_space<vmem>>, vector<1x256xf32>
    %cst_24 = arith.constant 0.000000e+00 : f32
    %47 = vector.broadcast %cst_24 : f32 to vector<1x256xf32>
    %48 = arith.cmpf ogt, %46, %47 : vector<1x256xf32>
    %cst_25 = arith.constant 0.000000e+00 : f32
    %49 = vector.shape_cast %48 : vector<1x256xi1> to vector<1x256xi1>
    %50 = vector.broadcast %49 : vector<1x256xi1> to vector<4x256xi1>
    %51 = vector.broadcast %cst_25 : f32 to vector<4x256xf32>
    %52 = arith.select %50, %45, %51 : vector<4x256xi1>, vector<4x256xf32>
    %c20 = arith.constant 20 : index
    %c0_26 = arith.constant 0 : index
    %53 = vector.load %arg6[%c20, %c0_26] : memref<36x256xf32, #tpu.memory_space<vmem>>, vector<4x256xf32>
    tpu.vector_store %arg6[%c20, %c0_26], %52 {strides = array<i32>} : memref<36x256xf32, #tpu.memory_space<vmem>>, vector<4x256xf32>,
    %c241_i32 = arith.constant 241 : i32
    %54 = tpu.dynamic_rotate %0 by %c241_i32 dim 1 : vector<4x256xf32>, i32 -> vector<4x256xf32>
    %c6 = arith.constant 6 : index
    %c0_27 = arith.constant 0 : index
    %55 = vector.load %arg4[%c6, %c0_27] : memref<9x256xf32, #tpu.memory_space<vmem>>, vector<1x256xf32>
    %cst_28 = arith.constant 0.000000e+00 : f32
    %56 = vector.broadcast %cst_28 : f32 to vector<1x256xf32>
    %57 = arith.cmpf ogt, %55, %56 : vector<1x256xf32>
    %cst_29 = arith.constant 0.000000e+00 : f32
    %58 = vector.shape_cast %57 : vector<1x256xi1> to vector<1x256xi1>
    %59 = vector.broadcast %58 : vector<1x256xi1> to vector<4x256xi1>
    %60 = vector.broadcast %cst_29 : f32 to vector<4x256xf32>
    %61 = arith.select %59, %54, %60 : vector<4x256xi1>, vector<4x256xf32>
    %c24 = arith.constant 24 : index
    %c0_30 = arith.constant 0 : index
    %62 = vector.load %arg6[%c24, %c0_30] : memref<36x256xf32, #tpu.memory_space<vmem>>, vector<4x256xf32>
    tpu.vector_store %arg6[%c24, %c0_30], %61 {strides = array<i32>} : memref<36x256xf32, #tpu.memory_space<vmem>>, vector<4x256xf32>,
    %c240_i32 = arith.constant 240 : i32
    %63 = tpu.dynamic_rotate %0 by %c240_i32 dim 1 : vector<4x256xf32>, i32 -> vector<4x256xf32>
    %c7 = arith.constant 7 : index
    %c0_31 = arith.constant 0 : index
    %64 = vector.load %arg4[%c7, %c0_31] : memref<9x256xf32, #tpu.memory_space<vmem>>, vector<1x256xf32>
    %cst_32 = arith.constant 0.000000e+00 : f32
    %65 = vector.broadcast %cst_32 : f32 to vector<1x256xf32>
    %66 = arith.cmpf ogt, %64, %65 : vector<1x256xf32>
    %cst_33 = arith.constant 0.000000e+00 : f32
    %67 = vector.shape_cast %66 : vector<1x256xi1> to vector<1x256xi1>
    %68 = vector.broadcast %67 : vector<1x256xi1> to vector<4x256xi1>
    %69 = vector.broadcast %cst_33 : f32 to vector<4x256xf32>
    %70 = arith.select %68, %63, %69 : vector<4x256xi1>, vector<4x256xf32>
    %c28 = arith.constant 28 : index
    %c0_34 = arith.constant 0 : index
    %71 = vector.load %arg6[%c28, %c0_34] : memref<36x256xf32, #tpu.memory_space<vmem>>, vector<4x256xf32>
    tpu.vector_store %arg6[%c28, %c0_34], %70 {strides = array<i32>} : memref<36x256xf32, #tpu.memory_space<vmem>>, vector<4x256xf32>,
    %c239_i32 = arith.constant 239 : i32
    %72 = tpu.dynamic_rotate %0 by %c239_i32 dim 1 : vector<4x256xf32>, i32 -> vector<4x256xf32>
    %c8_35 = arith.constant 8 : index
    %c0_36 = arith.constant 0 : index
    %73 = vector.load %arg4[%c8_35, %c0_36] : memref<9x256xf32, #tpu.memory_space<vmem>>, vector<1x256xf32>
    %cst_37 = arith.constant 0.000000e+00 : f32
    %74 = vector.broadcast %cst_37 : f32 to vector<1x256xf32>
    %75 = arith.cmpf ogt, %73, %74 : vector<1x256xf32>
    %cst_38 = arith.constant 0.000000e+00 : f32
    %76 = vector.shape_cast %75 : vector<1x256xi1> to vector<1x256xi1>
    %77 = vector.broadcast %76 : vector<1x256xi1> to vector<4x256xi1>
    %78 = vector.broadcast %cst_38 : f32 to vector<4x256xf32>
    %79 = arith.select %77, %72, %78 : vector<4x256xi1>, vector<4x256xf32>
    %c32 = arith.constant 32 : index
    %c0_39 = arith.constant 0 : index
    %80 = vector.load %arg6[%c32, %c0_39] : memref<36x256xf32, #tpu.memory_space<vmem>>, vector<4x256xf32>
    tpu.vector_store %arg6[%c32, %c0_39], %79 {strides = array<i32>} : memref<36x256xf32, #tpu.memory_space<vmem>>, vector<4x256xf32>,
    %c0_40 = arith.constant 0 : index
    %c0_41 = arith.constant 0 : index
    %81 = vector.load %arg2[%c0_40, %c0_41] : memref<4x36xf32, #tpu.memory_space<vmem>>, vector<4x36xf32>
    %c0_42 = arith.constant 0 : index
    %c0_43 = arith.constant 0 : index
    %82 = vector.load %arg6[%c0_42, %c0_43] : memref<36x256xf32, #tpu.memory_space<vmem>>, vector<36x256xf32>
    %cst_44 = arith.constant dense<0.000000e+00> : vector<4x256xf32>
    %83 = tpu.matmul %81, %82, %cst_44 {dimension_numbers = #tpu.dot_dimension_numbers<[1], [0], [0], [1], [0, 0, 1, 1], [], []>} : vector<4x36xf32>, vector<36x256xf32>, vector<4x256xf32> -> vector<4x256xf32>
    %84 = tpu.iota {dimensions = array<i32: 0>} : vector<4x4xi32>
    %85 = tpu.iota {dimensions = array<i32: 1>} : vector<4x4xi32>
    %cst_45 = arith.constant 1.000000e+00 : f32
    %86 = vector.broadcast %cst_45 : f32 to vector<4x1xf32>
    %cst_46 = arith.constant dense<0.000000e+00> : vector<4xf32>
    %87 = vector.multi_reduction <add>, %83, %cst_46 [1] : vector<4x256xf32> to vector<4xf32>
    %88 = vector.shape_cast %87 : vector<4xf32> to vector<4x1xf32>
    %cst_47 = arith.constant 3.906250e-03 : f32
    %89 = vector.broadcast %cst_47 : f32 to vector<4x1xf32>
    %90 = arith.mulf %88, %89 : vector<4x1xf32>
    %cst_48 = arith.constant dense<0.000000e+00> : vector<4x4xf32>
    %91 = tpu.matmul %86, %90, %cst_48 {dimension_numbers = #tpu.dot_dimension_numbers<[1], [1], [0], [0], [0, 0, 1, 0], [], []>} : vector<4x1xf32>, vector<4x1xf32>, vector<4x4xf32> -> vector<4x4xf32>
    %92 = vector.shape_cast %90 : vector<4x1xf32> to vector<4x1xf32>
    %93 = vector.broadcast %92 : vector<4x1xf32> to vector<4x4xf32>
    %94 = arith.cmpf ogt, %93, %91 : vector<4x4xf32>
    %95 = arith.cmpf oeq, %93, %91 : vector<4x4xf32>
    %96 = arith.cmpi slt, %84, %85 : vector<4x4xi32>
    %97 = arith.andi %95, %96 : vector<4x4xi1>
    %98 = arith.ori %94, %97 : vector<4x4xi1>
    %99 = arith.extui %98 : vector<4x4xi1> to vector<4x4xi32>
    %100 = arith.sitofp %99 : vector<4x4xi32> to vector<4x4xf32>
    %cst_49 = arith.constant dense<0.000000e+00> : vector<4xf32>
    %101 = vector.multi_reduction <add>, %100, %cst_49 [0] : vector<4x4xf32> to vector<4xf32>
    %102 = vector.shape_cast %101 : vector<4xf32> to vector<1x4xf32>
    %103 = vector.shape_cast %102 : vector<1x4xf32> to vector<1x4xf32>
    %104 = vector.broadcast %103 : vector<1x4xf32> to vector<4x4xf32>
    %105 = arith.sitofp %84 : vector<4x4xi32> to vector<4x4xf32>
    %106 = arith.cmpf oeq, %104, %105 : vector<4x4xf32>
    %107 = arith.extui %106 : vector<4x4xi1> to vector<4x4xi32>
    %108 = arith.sitofp %107 : vector<4x4xi32> to vector<4x4xf32>
    %cst_50 = arith.constant dense<0.000000e+00> : vector<4x256xf32>
    %109 = tpu.matmul %108, %83, %cst_50 {dimension_numbers = #tpu.dot_dimension_numbers<[1], [0], [0], [1], [0, 0, 1, 1], [], []>} : vector<4x4xf32>, vector<4x256xf32>, vector<4x256xf32> -> vector<4x256xf32>
    %c0_51 = arith.constant 0 : index
    %c0_52 = arith.constant 0 : index
    %110 = vector.load %arg7[%c0_51, %c0_52] : memref<4x256xf32, #tpu.memory_space<vmem>>, vector<4x256xf32>
    tpu.vector_store %arg7[%c0_51, %c0_52], %109 {strides = array<i32>} : memref<4x256xf32, #tpu.memory_space<vmem>>, vector<4x256xf32>,
    %c0_53 = arith.constant 0 : index
    %c0_54 = arith.constant 0 : index
    %111 = vector.load %arg7[%c0_53, %c0_54] : memref<4x256xf32, #tpu.memory_space<vmem>>, vector<4x256xf32>
    %c17_i32_55 = arith.constant 17 : i32
    %112 = tpu.dynamic_rotate %111 by %c17_i32_55 dim 1 : vector<4x256xf32>, i32 -> vector<4x256xf32>
    %c0_56 = arith.constant 0 : index
    %c0_57 = arith.constant 0 : index
    %113 = vector.load %arg4[%c0_56, %c0_57] : memref<9x256xf32, #tpu.memory_space<vmem>>, vector<1x256xf32>
    %cst_58 = arith.constant 0.000000e+00 : f32
    %114 = vector.broadcast %cst_58 : f32 to vector<1x256xf32>
    %115 = arith.cmpf ogt, %113, %114 : vector<1x256xf32>
    %cst_59 = arith.constant 0.000000e+00 : f32
    %116 = vector.shape_cast %115 : vector<1x256xi1> to vector<1x256xi1>
    %117 = vector.broadcast %116 : vector<1x256xi1> to vector<4x256xi1>
    %118 = vector.broadcast %cst_59 : f32 to vector<4x256xf32>
    %119 = arith.select %117, %112, %118 : vector<4x256xi1>, vector<4x256xf32>
    %c0_60 = arith.constant 0 : index
    %c0_61 = arith.constant 0 : index
    %120 = vector.load %arg6[%c0_60, %c0_61] : memref<36x256xf32, #tpu.memory_space<vmem>>, vector<4x256xf32>
    tpu.vector_store %arg6[%c0_60, %c0_61], %119 {strides = array<i32>} : memref<36x256xf32, #tpu.memory_space<vmem>>, vector<4x256xf32>,
    %c16_i32_62 = arith.constant 16 : i32
    %121 = tpu.dynamic_rotate %111 by %c16_i32_62 dim 1 : vector<4x256xf32>, i32 -> vector<4x256xf32>
    %c1_63 = arith.constant 1 : index
    %c0_64 = arith.constant 0 : index
    %122 = vector.load %arg4[%c1_63, %c0_64] : memref<9x256xf32, #tpu.memory_space<vmem>>, vector<1x256xf32>
    %cst_65 = arith.constant 0.000000e+00 : f32
    %123 = vector.broadcast %cst_65 : f32 to vector<1x256xf32>
    %124 = arith.cmpf ogt, %122, %123 : vector<1x256xf32>
    %cst_66 = arith.constant 0.000000e+00 : f32
    %125 = vector.shape_cast %124 : vector<1x256xi1> to vector<1x256xi1>
    %126 = vector.broadcast %125 : vector<1x256xi1> to vector<4x256xi1>
    %127 = vector.broadcast %cst_66 : f32 to vector<4x256xf32>
    %128 = arith.select %126, %121, %127 : vector<4x256xi1>, vector<4x256xf32>
    %c4_67 = arith.constant 4 : index
    %c0_68 = arith.constant 0 : index
    %129 = vector.load %arg6[%c4_67, %c0_68] : memref<36x256xf32, #tpu.memory_space<vmem>>, vector<4x256xf32>
    tpu.vector_store %arg6[%c4_67, %c0_68], %128 {strides = array<i32>} : memref<36x256xf32, #tpu.memory_space<vmem>>, vector<4x256xf32>,
    %c15_i32_69 = arith.constant 15 : i32
    %130 = tpu.dynamic_rotate %111 by %c15_i32_69 dim 1 : vector<4x256xf32>, i32 -> vector<4x256xf32>
    %c2_70 = arith.constant 2 : index
    %c0_71 = arith.constant 0 : index
    %131 = vector.load %arg4[%c2_70, %c0_71] : memref<9x256xf32, #tpu.memory_space<vmem>>, vector<1x256xf32>
    %cst_72 = arith.constant 0.000000e+00 : f32
    %132 = vector.broadcast %cst_72 : f32 to vector<1x256xf32>
    %133 = arith.cmpf ogt, %131, %132 : vector<1x256xf32>
    %cst_73 = arith.constant 0.000000e+00 : f32
    %134 = vector.shape_cast %133 : vector<1x256xi1> to vector<1x256xi1>
    %135 = vector.broadcast %134 : vector<1x256xi1> to vector<4x256xi1>
    %136 = vector.broadcast %cst_73 : f32 to vector<4x256xf32>
    %137 = arith.select %135, %130, %136 : vector<4x256xi1>, vector<4x256xf32>
    %c8_74 = arith.constant 8 : index
    %c0_75 = arith.constant 0 : index
    %138 = vector.load %arg6[%c8_74, %c0_75] : memref<36x256xf32, #tpu.memory_space<vmem>>, vector<4x256xf32>
    tpu.vector_store %arg6[%c8_74, %c0_75], %137 {strides = array<i32>} : memref<36x256xf32, #tpu.memory_space<vmem>>, vector<4x256xf32>,
    %c1_i32_76 = arith.constant 1 : i32
    %139 = tpu.dynamic_rotate %111 by %c1_i32_76 dim 1 : vector<4x256xf32>, i32 -> vector<4x256xf32>
    %c3_77 = arith.constant 3 : index
    %c0_78 = arith.constant 0 : index
    %140 = vector.load %arg4[%c3_77, %c0_78] : memref<9x256xf32, #tpu.memory_space<vmem>>, vector<1x256xf32>
    %cst_79 = arith.constant 0.000000e+00 : f32
    %141 = vector.broadcast %cst_79 : f32 to vector<1x256xf32>
    %142 = arith.cmpf ogt, %140, %141 : vector<1x256xf32>
    %cst_80 = arith.constant 0.000000e+00 : f32
    %143 = vector.shape_cast %142 : vector<1x256xi1> to vector<1x256xi1>
    %144 = vector.broadcast %143 : vector<1x256xi1> to vector<4x256xi1>
    %145 = vector.broadcast %cst_80 : f32 to vector<4x256xf32>
    %146 = arith.select %144, %139, %145 : vector<4x256xi1>, vector<4x256xf32>
    %c12_81 = arith.constant 12 : index
    %c0_82 = arith.constant 0 : index
    %147 = vector.load %arg6[%c12_81, %c0_82] : memref<36x256xf32, #tpu.memory_space<vmem>>, vector<4x256xf32>
    tpu.vector_store %arg6[%c12_81, %c0_82], %146 {strides = array<i32>} : memref<36x256xf32, #tpu.memory_space<vmem>>, vector<4x256xf32>,
    %c4_83 = arith.constant 4 : index
    %c0_84 = arith.constant 0 : index
    %148 = vector.load %arg4[%c4_83, %c0_84] : memref<9x256xf32, #tpu.memory_space<vmem>>, vector<1x256xf32>
    %cst_85 = arith.constant 0.000000e+00 : f32
    %149 = vector.broadcast %cst_85 : f32 to vector<1x256xf32>
    %150 = arith.cmpf ogt, %148, %149 : vector<1x256xf32>
    %cst_86 = arith.constant 0.000000e+00 : f32
    %151 = vector.shape_cast %150 : vector<1x256xi1> to vector<1x256xi1>
    %152 = vector.broadcast %151 : vector<1x256xi1> to vector<4x256xi1>
    %153 = vector.broadcast %cst_86 : f32 to vector<4x256xf32>
    %154 = arith.select %152, %111, %153 : vector<4x256xi1>, vector<4x256xf32>
    %c16_87 = arith.constant 16 : index
    %c0_88 = arith.constant 0 : index
    %155 = vector.load %arg6[%c16_87, %c0_88] : memref<36x256xf32, #tpu.memory_space<vmem>>, vector<4x256xf32>
    tpu.vector_store %arg6[%c16_87, %c0_88], %154 {strides = array<i32>} : memref<36x256xf32, #tpu.memory_space<vmem>>, vector<4x256xf32>,
    %c255_i32_89 = arith.constant 255 : i32
    %156 = tpu.dynamic_rotate %111 by %c255_i32_89 dim 1 : vector<4x256xf32>, i32 -> vector<4x256xf32>
    %c5_90 = arith.constant 5 : index
    %c0_91 = arith.constant 0 : index
    %157 = vector.load %arg4[%c5_90, %c0_91] : memref<9x256xf32, #tpu.memory_space<vmem>>, vector<1x256xf32>
    %cst_92 = arith.constant 0.000000e+00 : f32
    %158 = vector.broadcast %cst_92 : f32 to vector<1x256xf32>
    %159 = arith.cmpf ogt, %157, %158 : vector<1x256xf32>
    %cst_93 = arith.constant 0.000000e+00 : f32
    %160 = vector.shape_cast %159 : vector<1x256xi1> to vector<1x256xi1>
    %161 = vector.broadcast %160 : vector<1x256xi1> to vector<4x256xi1>
    %162 = vector.broadcast %cst_93 : f32 to vector<4x256xf32>
    %163 = arith.select %161, %156, %162 : vector<4x256xi1>, vector<4x256xf32>
    %c20_94 = arith.constant 20 : index
    %c0_95 = arith.constant 0 : index
    %164 = vector.load %arg6[%c20_94, %c0_95] : memref<36x256xf32, #tpu.memory_space<vmem>>, vector<4x256xf32>
    tpu.vector_store %arg6[%c20_94, %c0_95], %163 {strides = array<i32>} : memref<36x256xf32, #tpu.memory_space<vmem>>, vector<4x256xf32>,
    %c241_i32_96 = arith.constant 241 : i32
    %165 = tpu.dynamic_rotate %111 by %c241_i32_96 dim 1 : vector<4x256xf32>, i32 -> vector<4x256xf32>
    %c6_97 = arith.constant 6 : index
    %c0_98 = arith.constant 0 : index
    %166 = vector.load %arg4[%c6_97, %c0_98] : memref<9x256xf32, #tpu.memory_space<vmem>>, vector<1x256xf32>
    %cst_99 = arith.constant 0.000000e+00 : f32
    %167 = vector.broadcast %cst_99 : f32 to vector<1x256xf32>
    %168 = arith.cmpf ogt, %166, %167 : vector<1x256xf32>
    %cst_100 = arith.constant 0.000000e+00 : f32
    %169 = vector.shape_cast %168 : vector<1x256xi1> to vector<1x256xi1>
    %170 = vector.broadcast %169 : vector<1x256xi1> to vector<4x256xi1>
    %171 = vector.broadcast %cst_100 : f32 to vector<4x256xf32>
    %172 = arith.select %170, %165, %171 : vector<4x256xi1>, vector<4x256xf32>
    %c24_101 = arith.constant 24 : index
    %c0_102 = arith.constant 0 : index
    %173 = vector.load %arg6[%c24_101, %c0_102] : memref<36x256xf32, #tpu.memory_space<vmem>>, vector<4x256xf32>
    tpu.vector_store %arg6[%c24_101, %c0_102], %172 {strides = array<i32>} : memref<36x256xf32, #tpu.memory_space<vmem>>, vector<4x256xf32>,
    %c240_i32_103 = arith.constant 240 : i32
    %174 = tpu.dynamic_rotate %111 by %c240_i32_103 dim 1 : vector<4x256xf32>, i32 -> vector<4x256xf32>
    %c7_104 = arith.constant 7 : index
    %c0_105 = arith.constant 0 : index
    %175 = vector.load %arg4[%c7_104, %c0_105] : memref<9x256xf32, #tpu.memory_space<vmem>>, vector<1x256xf32>
    %cst_106 = arith.constant 0.000000e+00 : f32
    %176 = vector.broadcast %cst_106 : f32 to vector<1x256xf32>
    %177 = arith.cmpf ogt, %175, %176 : vector<1x256xf32>
    %cst_107 = arith.constant 0.000000e+00 : f32
    %178 = vector.shape_cast %177 : vector<1x256xi1> to vector<1x256xi1>
    %179 = vector.broadcast %178 : vector<1x256xi1> to vector<4x256xi1>
    %180 = vector.broadcast %cst_107 : f32 to vector<4x256xf32>
    %181 = arith.select %179, %174, %180 : vector<4x256xi1>, vector<4x256xf32>
    %c28_108 = arith.constant 28 : index
    %c0_109 = arith.constant 0 : index
    %182 = vector.load %arg6[%c28_108, %c0_109] : memref<36x256xf32, #tpu.memory_space<vmem>>, vector<4x256xf32>
    tpu.vector_store %arg6[%c28_108, %c0_109], %181 {strides = array<i32>} : memref<36x256xf32, #tpu.memory_space<vmem>>, vector<4x256xf32>,
    %c239_i32_110 = arith.constant 239 : i32
    %183 = tpu.dynamic_rotate %111 by %c239_i32_110 dim 1 : vector<4x256xf32>, i32 -> vector<4x256xf32>
    %c8_111 = arith.constant 8 : index
    %c0_112 = arith.constant 0 : index
    %184 = vector.load %arg4[%c8_111, %c0_112] : memref<9x256xf32, #tpu.memory_space<vmem>>, vector<1x256xf32>
    %cst_113 = arith.constant 0.000000e+00 : f32
    %185 = vector.broadcast %cst_113 : f32 to vector<1x256xf32>
    %186 = arith.cmpf ogt, %184, %185 : vector<1x256xf32>
    %cst_114 = arith.constant 0.000000e+00 : f32
    %187 = vector.shape_cast %186 : vector<1x256xi1> to vector<1x256xi1>
    %188 = vector.broadcast %187 : vector<1x256xi1> to vector<4x256xi1>
    %189 = vector.broadcast %cst_114 : f32 to vector<4x256xf32>
    %190 = arith.select %188, %183, %189 : vector<4x256xi1>, vector<4x256xf32>
    %c32_115 = arith.constant 32 : index
    %c0_116 = arith.constant 0 : index
    %191 = vector.load %arg6[%c32_115, %c0_116] : memref<36x256xf32, #tpu.memory_space<vmem>>, vector<4x256xf32>
    tpu.vector_store %arg6[%c32_115, %c0_116], %190 {strides = array<i32>} : memref<36x256xf32, #tpu.memory_space<vmem>>, vector<4x256xf32>,
    %c0_117 = arith.constant 0 : index
    %c0_118 = arith.constant 0 : index
    %192 = vector.load %arg3[%c0_117, %c0_118] : memref<4x36xf32, #tpu.memory_space<vmem>>, vector<4x36xf32>
    %c0_119 = arith.constant 0 : index
    %c0_120 = arith.constant 0 : index
    %193 = vector.load %arg6[%c0_119, %c0_120] : memref<36x256xf32, #tpu.memory_space<vmem>>, vector<36x256xf32>
    %cst_121 = arith.constant dense<0.000000e+00> : vector<4x256xf32>
    %194 = tpu.matmul %192, %193, %cst_121 {dimension_numbers = #tpu.dot_dimension_numbers<[1], [0], [0], [1], [0, 0, 1, 1], [], []>} : vector<4x36xf32>, vector<36x256xf32>, vector<4x256xf32> -> vector<4x256xf32>
    %c0_122 = arith.constant 0 : index
    %c0_123 = arith.constant 0 : index
    %195 = vector.load %arg5[%c0_122, %c0_123] : memref<4x256xf32, #tpu.memory_space<vmem>>, vector<4x256xf32>
    tpu.vector_store %arg5[%c0_122, %c0_123], %194 {strides = array<i32>} : memref<4x256xf32, #tpu.memory_space<vmem>>, vector<4x256xf32>,
    return
  }
  func.func @transform_0(%arg0: i32) -> (i32, i32) {
    %c0_i32 = arith.constant 0 : i32
    %c0_i32_0 = arith.constant 0 : i32
    return %c0_i32, %arg0 : i32, i32
  }
  func.func @transform_1(%arg0: i32) -> (i32, i32) {
    %c0_i32 = arith.constant 0 : i32
    %c0_i32_0 = arith.constant 0 : i32
    %c0_i32_1 = arith.constant 0 : i32
    return %c0_i32, %c0_i32_0 : i32, i32
  }
  func.func @transform_2(%arg0: i32) -> (i32, i32) {
    %c0_i32 = arith.constant 0 : i32
    %c0_i32_0 = arith.constant 0 : i32
    %c0_i32_1 = arith.constant 0 : i32
    return %c0_i32, %c0_i32_0 : i32, i32
  }
  func.func @transform_3(%arg0: i32) -> (i32, i32) {
    %c0_i32 = arith.constant 0 : i32
    %c0_i32_0 = arith.constant 0 : i32
    %c0_i32_1 = arith.constant 0 : i32
    return %c0_i32, %c0_i32_0 : i32, i32
  }
  func.func @transform_4(%arg0: i32) -> (i32, i32) {
    %c0_i32 = arith.constant 0 : i32
    %c0_i32_0 = arith.constant 0 : i32
    return %c0_i32, %arg0 : i32, i32
  }
}

</mosaic_0001>

<llo_original>
// kernel: tpu_custom_call.1
$region0: #{tpu_custom_call.1}
  #allocation0 [shape = 'u32[]', space=smem, size = 0x4, offset = 0x4, fixed_abs, tag = 'smem constant byte address 0x4 - core index']
  #allocation1 [shape = 'u32[144,128]{1,0:T(1,128)}', space=vmem, size = 0x12000, scoped, tag = 'internal scratch']
  #allocation2 [shape = 'f32[36,256]{1,0:T(8,128)}', space=vmem, size = 0xa000, scoped, tag = 'scratch operand']
  #allocation3 [shape = 'f32[4,256]{1,0:T(4,128)}', space=vmem, size = 0x1000, scoped, tag = 'scratch operand']
  %s0 = inlined_call_operand.hbm [shape: f32[4,512], index: 0, kind: input, shape index: {}]
  %s1 = inlined_call_operand.hbm [shape: f32[4,36], index: 1, kind: input, shape index: {}]
  %s2 = inlined_call_operand.vmem [shape: f32[4,36], index: 2, kind: input, shape index: {}]
  %s3 = inlined_call_operand.hbm [shape: f32[9,256], index: 3, kind: input, shape index: {}]
  %s4 = inlined_call_operand.hbm [shape: f32[4,512], index: 4, kind: output, shape index: {}]
  %s5 = sld [smem:[#allocation0]]
  $region61: #{tpu_custom_call.1} parent=0
    _
  %s7 = ssub.s32 1, %s5
  %s8 = scalar_select 0, %s7, %s5
  $region1: #{tpu_custom_call.1} parent=0
    #allocation4 [shape = 'u8[8192]{0}', space=vmem, size = 0x2000, scoped, tag = 'input window, operand 0']
    #allocation5 [shape = 's32[2]{0}', space=sflag, size = 0x8, scoped, tag = 'scoped memory for tpu_custom_call.1']
    #allocation6 [shape = 's32[2]{0}', space=sflag, size = 0x8, scoped, tag = 'scoped memory for tpu_custom_call.1']
    #allocation7 [shape = 'u8[2048]{0}', space=vmem, size = 0x800, scoped, tag = 'input window, operand 1, single buffered']
    #allocation8 [shape = 's32[1]{0}', space=sflag, size = 0x4, scoped, tag = 'scoped memory for tpu_custom_call.1']
    #allocation9 [shape = 'u8[16384]{0}', space=vmem, size = 0x4000, scoped, tag = 'input window, operand 3, single buffered']
    #allocation10 [shape = 'u8[8192]{0}', space=vmem, size = 0x2000, scoped, tag = 'output window, operand 0']
    %9 = vsyncpa [#allocation5], 0
    %s10 = scalar_lea.sflag [#allocation5], 1
    %11 = vsyncpa %s10, 0
    %12 = vsyncpa [#allocation8], 0
    %13 = vsyncpa [#allocation6], 0
    %s14 = scalar_lea.sflag [#allocation6], 1
    %15 = vsyncpa %s14, 0
    loop: start=0, step=1, limit=4
    $region2: #{tpu_custom_call.1} parent=1 // loop_pre_header
      _
    $region3: #{tpu_custom_call.1} parent=1 // loop_header
      %s17 = sphi 0, %s21
      %p18 = scmp.ge.s32.totalorder %s17, 4
      %s27 = sphi 0, %s29
      %s30 = sphi 0, %s27
      %s31 = sphi 0, %s30
      %s47 = sphi 0, %s31
      %s51 = sphi 0, %s51
      %s53 = sphi 0, %s51
      %s54 = sphi 0, %s53
      %s68 = sphi 0, %s54
      %s72 = sphi 0, %s72
      %s74 = sphi 0, %s72
      %s75 = sphi 0, %s74
      %s89 = sphi 0, %s75
      %s93 = sphi 0, %s93
      %s95 = sphi 0, %s93
      %s96 = sphi 0, %s95
      %s110 = sphi 0, %s96
      %s116 = sphi 0, %s118
      %s119 = sphi 0, %s116
      %s120 = sphi 0, %s119
      %s136 = sphi 0, %s120
    $region4: #{tpu_custom_call.1} parent=1 // loop_header_branch
      %20 = sbr.rel (%p18) target = $region8
    $region5: #{tpu_custom_call.1} parent=1 // loop_body
      %s22 = ssub.s32 %s17, 1
      %s23 = ssub.s32 %s17, 2
      %s24 = sadd.s32 %s17, 1
      %s25 = ssub.s32 %s17, %s24
      %p26 = scmp.eq.s32.totalorder %s25, 0
      %s28 = sadd.s32 %s27, 1
      %s29 = scalar_select %p26, %s27, %s28
      %p32 = pneg %p26
      %p33 = scmp.eq.s32.totalorder %s17, 1
      %p34 = por %p32, %p33
      %p35 = scmp.ne.s32.totalorder %s27, %s30
      %p36 = scmp.eq.s32.totalorder %s17, 0
      %p37 = por %p35, %p36
      %p38 = scmp.ne.s32.totalorder %s27, %s30
      %p39 = scmp.eq.s32.totalorder %s22, 1
      %p40 = por %p38, %p39
      %p41 = scmp.ne.s32.totalorder %s30, %s31
      %p42 = scmp.eq.s32.totalorder %s22, 0
      %p43 = por %p41, %p42
      %p44 = scmp.ne.s32.totalorder %s30, %s31
      %p45 = scmp.eq.s32.totalorder %s23, 1
      %p46 = por %p44, %p45
      %p48 = scmp.ne.s32.totalorder %s31, %s47
      %p49 = scmp.eq.s32.totalorder %s23, 0
      %p50 = por %p48, %p49
      %s52 = sadd.s32 %s51, 1
      %p55 = scmp.eq.s32.totalorder %s17, 1
      %p56 = scmp.ne.s32.totalorder %s51, %s53
      %p57 = scmp.eq.s32.totalorder %s17, 0
      %p58 = por %p56, %p57
      %p59 = scmp.ne.s32.totalorder %s51, %s53
      %p60 = scmp.eq.s32.totalorder %s22, 1
      %p61 = por %p59, %p60
      %p62 = scmp.ne.s32.totalorder %s53, %s54
      %p63 = scmp.eq.s32.totalorder %s22, 0
      %p64 = por %p62, %p63
      %p65 = scmp.ne.s32.totalorder %s53, %s54
      %p66 = scmp.eq.s32.totalorder %s23, 1
      %p67 = por %p65, %p66
      %p69 = scmp.ne.s32.totalorder %s54, %s68
      %p70 = scmp.eq.s32.totalorder %s23, 0
      %p71 = por %p69, %p70
      %s73 = sadd.s32 %s72, 1
      %p76 = scmp.eq.s32.totalorder %s17, 1
      %p77 = scmp.ne.s32.totalorder %s72, %s74
      %p78 = scmp.eq.s32.totalorder %s17, 0
      %p79 = por %p77, %p78
      %p80 = scmp.ne.s32.totalorder %s72, %s74
      %p81 = scmp.eq.s32.totalorder %s22, 1
      %p82 = por %p80, %p81
      %p83 = scmp.ne.s32.totalorder %s74, %s75
      %p84 = scmp.eq.s32.totalorder %s22, 0
      %p85 = por %p83, %p84
      %p86 = scmp.ne.s32.totalorder %s74, %s75
      %p87 = scmp.eq.s32.totalorder %s23, 1
      %p88 = por %p86, %p87
      %p90 = scmp.ne.s32.totalorder %s75, %s89
      %p91 = scmp.eq.s32.totalorder %s23, 0
      %p92 = por %p90, %p91
      %s94 = sadd.s32 %s93, 1
      %p97 = scmp.eq.s32.totalorder %s17, 1
      %p98 = scmp.ne.s32.totalorder %s93, %s95
      %p99 = scmp.eq.s32.totalorder %s17, 0
      %p100 = por %p98, %p99
      %p101 = scmp.ne.s32.totalorder %s93, %s95
      %p102 = scmp.eq.s32.totalorder %s22, 1
      %p103 = por %p101, %p102
      %p104 = scmp.ne.s32.totalorder %s95, %s96
      %p105 = scmp.eq.s32.totalorder %s22, 0
      %p106 = por %p104, %p105
      %p107 = scmp.ne.s32.totalorder %s95, %s96
      %p108 = scmp.eq.s32.totalorder %s23, 1
      %p109 = por %p107, %p108
      %p111 = scmp.ne.s32.totalorder %s96, %s110
      %p112 = scmp.eq.s32.totalorder %s23, 0
      %p113 = por %p111, %p112
      %s114 = ssub.s32 %s17, %s24
      %p115 = scmp.eq.s32.totalorder %s114, 0
      %s117 = sadd.s32 %s116, 1
      %s118 = scalar_select %p115, %s116, %s117
      %p121 = pneg %p115
      %p122 = scmp.eq.s32.totalorder %s17, 1
      %p123 = por %p121, %p122
      %p124 = scmp.ne.s32.totalorder %s116, %s119
      %p125 = scmp.eq.s32.totalorder %s17, 0
      %p126 = por %p124, %p125
      %p127 = scmp.ne.s32.totalorder %s116, %s119
      %p128 = scmp.eq.s32.totalorder %s22, 1
      %p129 = por %p127, %p128
      %p130 = scmp.ne.s32.totalorder %s119, %s120
      %p131 = scmp.eq.s32.totalorder %s22, 0
      %p132 = por %p130, %p131
      %p133 = scmp.ne.s32.totalorder %s119, %s120
      %p134 = scmp.eq.s32.totalorder %s23, 1
      %p135 = por %p133, %p134
      %p137 = scmp.ne.s32.totalorder %s120, %s136
      %p138 = scmp.eq.s32.totalorder %s23, 0
      %p139 = por %p137, %p138
      %p140 = scmp.le.s32.totalorder 1, %s17
      %p141 = scmp.lt.s32.totalorder %s17, 3
      %p142 = pnand %p140, %p141
      %p143 = pneg %p142
      // Predicated region
      $region9: #{tpu_custom_call.1} parent=5 // pred_check
        _
      $region10: #{tpu_custom_call.1} parent=5 // pred_check_branch
        %145 = sbr.rel (%p142) target = $region12
      $region11: #{tpu_custom_call.1} parent=5 // pred_region
        %s146 = ssub.s32 %s17, 1
        // Predicated region
        $region13: #{tpu_custom_call.1} parent=11 // pred_check
          %p147 = pneg %p64
        $region14: #{tpu_custom_call.1} parent=11 // pred_check_branch
          %149 = sbr.rel (%p147) target = $region16
        $region15: #{tpu_custom_call.1} parent=11 // pred_region
          %s151 = ssub.s32 64, 64
          %152 = vsyncadd [#allocation8], %s151
          %s154 = sshll.u32 [#allocation7], 4
          %s155 = int_to_ptr.vmem [resolvable:$true] %s154
          %157 = dma.hbm_to_vmem [thread:$0]  %s1, 64, %s155, [#allocation8]
        $region16: #{tpu_custom_call.1} parent=11 // pred_fallthru
          _
        // Predicated region
        $region17: #{tpu_custom_call.1} parent=11 // pred_check
          %p158 = pneg %p85
        $region18: #{tpu_custom_call.1} parent=11 // pred_check_branch
          %160 = sbr.rel (%p158) target = $region20
        $region19: #{tpu_custom_call.1} parent=11 // pred_region
          _
        $region20: #{tpu_custom_call.1} parent=11 // pred_fallthru
          _
        // Predicated region
        $region21: #{tpu_custom_call.1} parent=11 // pred_check
          %p161 = pneg %p106
        $region22: #{tpu_custom_call.1} parent=11 // pred_check_branch
          %163 = sbr.rel (%p161) target = $region24
        $region23: #{tpu_custom_call.1} parent=11 // pred_region
          %s165 = ssub.s32 512, 512
          %166 = vsyncadd [#allocation8], %s165
          %s167 = sshll.u32 [#allocation9], 4
          %s168 = int_to_ptr.vmem [resolvable:$true] %s167
          %173 = dma.hbm_to_vmem [thread:$0]  %s3, 512, %s168, [#allocation8], 256, 256, 16
        $region24: #{tpu_custom_call.1} parent=11 // pred_fallthru
          _
      $region12: #{tpu_custom_call.1} parent=5 // pred_fallthru
        _
      %p174 = scmp.lt.s32.totalorder %s17, 2
      // Predicated region
      $region25: #{tpu_custom_call.1} parent=5 // pred_check
        %p175 = pneg %p174
      $region26: #{tpu_custom_call.1} parent=5 // pred_check_branch
        %177 = sbr.rel (%p175) target = $region28
      $region27: #{tpu_custom_call.1} parent=5 // pred_region
        // Predicated region
        $region29: #{tpu_custom_call.1} parent=27 // pred_check
          %p178 = pneg %p37
        $region30: #{tpu_custom_call.1} parent=27 // pred_check_branch
          %180 = sbr.rel (%p178) target = $region32
        $region31: #{tpu_custom_call.1} parent=27 // pred_region
          %s181 = sand.u32 %s27, 1
          %s182 = scalar_lea.sflag [#allocation5], %s181
          %s183 = sand.u32 %s27, 1
          %s184 = smul.addr %s183, 8
          %s185 = scalar_lea.vmem [#allocation4], %s184
          %s186 = smul.u32 2, %s17
          %s188 = ssub.s32 128, 128
          %189 = vsyncadd %s182, %s188
          %s190 = smul.addr %s186, 64
          %s191 = scalar_lea.hbm %s0, %s190
          %s193 = sshll.u32 %s185, 4
          %s194 = int_to_ptr.vmem [resolvable:$true] %s193
          %196 = dma.hbm_to_vmem [thread:$0]  %s191, 128, %s194, %s182
        $region32: #{tpu_custom_call.1} parent=27 // pred_fallthru
          _
      $region28: #{tpu_custom_call.1} parent=5 // pred_fallthru
        _
      %p197 = scmp.le.s32.totalorder 1, %s17
      %p198 = scmp.lt.s32.totalorder %s17, 3
      %p199 = pnand %p197, %p198
      %p200 = pneg %p199
      // Predicated region
      $region33: #{tpu_custom_call.1} parent=5 // pred_check
        _
      $region34: #{tpu_custom_call.1} parent=5 // pred_check_branch
        %202 = sbr.rel (%p199) target = $region36
      $region35: #{tpu_custom_call.1} parent=5 // pred_region
        %s203 = ssub.s32 %s17, 1
        %s204 = sand.u32 %s30, 1
        %s205 = scalar_lea.sflag [#allocation5], %s204
        %s206 = sand.u32 %s30, 1
        %s207 = smul.addr %s206, 8
        %s208 = scalar_lea.vmem [#allocation4], %s207
        // Predicated region
        $region37: #{tpu_custom_call.1} parent=35 // pred_check
          %p209 = pneg %p43
        $region38: #{tpu_custom_call.1} parent=35 // pred_check_branch
          %211 = sbr.rel (%p209) target = $region40
        $region39: #{tpu_custom_call.1} parent=35 // pred_region
          %212 = dma.done %s205, 128
        $region40: #{tpu_custom_call.1} parent=35 // pred_fallthru
          _
        // Predicated region
        $region41: #{tpu_custom_call.1} parent=35 // pred_check
          %p213 = pneg %p64
        $region42: #{tpu_custom_call.1} parent=35 // pred_check_branch
          %215 = sbr.rel (%p213) target = $region44
        $region43: #{tpu_custom_call.1} parent=35 // pred_region
          %216 = dma.done [#allocation8], 64
        $region44: #{tpu_custom_call.1} parent=35 // pred_fallthru
          _
        // Predicated region
        $region45: #{tpu_custom_call.1} parent=35 // pred_check
          %p217 = pneg %p106
        $region46: #{tpu_custom_call.1} parent=35 // pred_check_branch
          %219 = sbr.rel (%p217) target = $region48
        $region47: #{tpu_custom_call.1} parent=35 // pred_region
          %220 = dma.done [#allocation8], 512
        $region48: #{tpu_custom_call.1} parent=35 // pred_fallthru
          _
        %s221 = sand.u32 %s30, 1
        %s222 = scalar_lea.sflag [#allocation5], %s221
        %s223 = sand.u32 %s30, 1
        %s224 = smul.addr %s223, 8
        %s225 = scalar_lea.vmem [#allocation4], %s224
        %p226 = pneg %p43
        %p227 = pneg %p40
        %p228 = pneg %p64
        %p229 = pneg %p61
        %p230 = pneg %p85
        %p231 = pneg %p82
        %p232 = pneg %p106
        %p233 = pneg %p103
        %p234 = pneg %p132
        %p235 = pneg %p129
        %s236 = sand.u32 %s119, 1
        %s237 = scalar_lea.sflag [#allocation6], %s236
        %s238 = sand.u32 %s119, 1
        %s239 = smul.addr %s238, 8
        %s240 = scalar_lea.vmem [#allocation10], %s239
        %s241 = smul.u32 2, %s22
        %s242 = smul.u32 2, %s22
        %v243 = vld [vmem:[%s208] sm:$0xff]
        %v245 = vcombine.high %v243, %v243
        %247 = vrot.lane.b32.xlu0 %v243, 17
        %v248 = vpop.permute.xlu0 %247
        %249 = vrot.lane.b32.xlu0 %v245, 17
        %v250 = vpop.permute.xlu0 %249
        %v251 = vlaneseq
        %v252 = vand.u32 %v251, 127
        %vm253 = vcmp.lt.s32.totalorder %v252, 17
        %v254 = vsel %vm253, %v248, %v250
        %v255 = vsel %vm253, %v250, %v248
        %v256 = vld [vmem:[#allocation9] ss:$8 sm:$0x3]
        %vm257 = vcmp.gt.f32.partialorder %v256, 0.0
        %v258 = vsel %vm257, 1, 0
        %v259 = vlaneseq
        %v260 = vshrl.u32 %v259, 7
        %v261 = vsub.s32 0, %v260
        %v262 = vrot.slane %v258, %v261
        %v263 = vlaneseq
        %v264 = vshrl.u32 %v263, 7
        %v265 = vsub.s32 1, %v264
        %v266 = vrot.slane %v258, %v265
        %vm267 = vcmp.eq.s32.totalorder %v262, 1
        %vm268 = vcmp.eq.s32.totalorder %v266, 1
        %v269 = vsel %vm267, %v255, 0.0
        %v270 = vsel %vm268, %v254, 0.0
        %271 = vst [vmem:[#allocation2] sm:$0xf] %v269
        %272 = vst [vmem:[#allocation2 + $0x8] sm:$0xf] %v270
        %273 = vrot.lane.b32.xlu0 %v243, 16
        %v274 = vpop.permute.xlu0 %273
        %275 = vrot.lane.b32.xlu0 %v245, 16
        %v276 = vpop.permute.xlu0 %275
        %vm277 = vcmp.lt.s32.totalorder %v252, 16
        %v278 = vsel %vm277, %v274, %v276
        %v279 = vsel %vm277, %v276, %v274
        %s280 = scalar_lea.vmem [#allocation9], 1
        %v281 = vld [vmem:[%s280] ss:$8 sm:$0x3]
        %vm282 = vcmp.gt.f32.partialorder %v281, 0.0
        %v283 = vsel %vm282, 1, 0
        %v284 = vlaneseq
        %v285 = vshrl.u32 %v284, 7
        %v286 = vsub.s32 0, %v285
        %v287 = vrot.slane %v283, %v286
        %v288 = vlaneseq
        %v289 = vshrl.u32 %v288, 7
        %v290 = vsub.s32 1, %v289
        %v291 = vrot.slane %v283, %v290
        %vm292 = vcmp.eq.s32.totalorder %v287, 1
        %vm293 = vcmp.eq.s32.totalorder %v291, 1
        %v294 = vsel %vm292, %v279, 0.0
        %v295 = vsel %vm293, %v278, 0.0
        %v298 = vrot.slane %v294, 4
        %v299 = vrot.slane %v295, 4
        %302 = vst [vmem:[#allocation2] sm:$0xf0] %v298
        %303 = vst [vmem:[#allocation2 + $0x8] sm:$0xf0] %v299
        %304 = vrot.lane.b32.xlu0 %v243, 15
        %v305 = vpop.permute.xlu0 %304
        %306 = vrot.lane.b32.xlu0 %v245, 15
        %v307 = vpop.permute.xlu0 %306
        %vm308 = vcmp.lt.s32.totalorder %v252, 15
        %v309 = vsel %vm308, %v305, %v307
        %v310 = vsel %vm308, %v307, %v305
        %s311 = scalar_lea.vmem [#allocation9], 2
        %v312 = vld [vmem:[%s311] ss:$8 sm:$0x3]
        %vm313 = vcmp.gt.f32.partialorder %v312, 0.0
        %v314 = vsel %vm313, 1, 0
        %v315 = vlaneseq
        %v316 = vshrl.u32 %v315, 7
        %v317 = vsub.s32 0, %v316
        %v318 = vrot.slane %v314, %v317
        %v319 = vlaneseq
        %v320 = vshrl.u32 %v319, 7
        %v321 = vsub.s32 1, %v320
        %v322 = vrot.slane %v314, %v321
        %vm323 = vcmp.eq.s32.totalorder %v318, 1
        %vm324 = vcmp.eq.s32.totalorder %v322, 1
        %v325 = vsel %vm323, %v310, 0.0
        %v326 = vsel %vm324, %v309, 0.0
        %327 = vst [vmem:[#allocation2 + $0x10] sm:$0xf] %v325
        %328 = vst [vmem:[#allocation2 + $0x18] sm:$0xf] %v326
        %329 = vrot.lane.b32.xlu0 %v243, 1
        %v330 = vpop.permute.xlu0 %329
        %331 = vrot.lane.b32.xlu0 %v245, 1
        %v332 = vpop.permute.xlu0 %331
        %vm333 = vcmp.lt.s32.totalorder %v252, 1
        %v334 = vsel %vm333, %v330, %v332
        %v335 = vsel %vm333, %v332, %v330
        %s336 = scalar_lea.vmem [#allocation9], 3
        %v337 = vld [vmem:[%s336] ss:$8 sm:$0x3]
        %vm338 = vcmp.gt.f32.partialorder %v337, 0.0
        %v339 = vsel %vm338, 1, 0
        %v340 = vlaneseq
        %v341 = vshrl.u32 %v340, 7
        %v342 = vsub.s32 0, %v341
        %v343 = vrot.slane %v339, %v342
        %v344 = vlaneseq
        %v345 = vshrl.u32 %v344, 7
        %v346 = vsub.s32 1, %v345
        %v347 = vrot.slane %v339, %v346
        %vm348 = vcmp.eq.s32.totalorder %v343, 1
        %vm349 = vcmp.eq.s32.totalorder %v347, 1
        %v350 = vsel %vm348, %v335, 0.0
        %v351 = vsel %vm349, %v334, 0.0
        %v354 = vrot.slane %v350, 4
        %v355 = vrot.slane %v351, 4
        %358 = vst [vmem:[#allocation2 + $0x10] sm:$0xf0] %v354
        %359 = vst [vmem:[#allocation2 + $0x18] sm:$0xf0] %v355
        %s360 = scalar_lea.vmem [#allocation9], 4
        %v361 = vld [vmem:[%s360] ss:$8 sm:$0x3]
        %vm362 = vcmp.gt.f32.partialorder %v361, 0.0
        %v363 = vsel %vm362, 1, 0
        %v364 = vlaneseq
        %v365 = vshrl.u32 %v364, 7
        %v366 = vsub.s32 0, %v365
        %v367 = vrot.slane %v363, %v366
        %v368 = vlaneseq
        %v369 = vshrl.u32 %v368, 7
        %v370 = vsub.s32 1, %v369
        %v371 = vrot.slane %v363, %v370
        %vm372 = vcmp.eq.s32.totalorder %v367, 1
        %vm373 = vcmp.eq.s32.totalorder %v371, 1
        %v374 = vsel %vm372, %v243, 0.0
        %v375 = vsel %vm373, %v245, 0.0
        %376 = vst [vmem:[#allocation2 + $0x20] sm:$0xf] %v374
        %377 = vst [vmem:[#allocation2 + $0x28] sm:$0xf] %v375
        %378 = vrot.lane.b32.xlu0 %v243, 127
        %v379 = vpop.permute.xlu0 %378
        %380 = vrot.lane.b32.xlu0 %v245, 127
        %v381 = vpop.permute.xlu0 %380
        %vm382 = vcmp.lt.s32.totalorder %v252, 127
        %v383 = vsel %vm382, %v379, %v381
        %v384 = vsel %vm382, %v381, %v379
        %s385 = scalar_lea.vmem [#allocation9], 5
        %v386 = vld [vmem:[%s385] ss:$8 sm:$0x3]
        %vm387 = vcmp.gt.f32.partialorder %v386, 0.0
        %v388 = vsel %vm387, 1, 0
        %v389 = vlaneseq
        %v390 = vshrl.u32 %v389, 7
        %v391 = vsub.s32 0, %v390
        %v392 = vrot.slane %v388, %v391
        %v393 = vlaneseq
        %v394 = vshrl.u32 %v393, 7
        %v395 = vsub.s32 1, %v394
        %v396 = vrot.slane %v388, %v395
        %vm397 = vcmp.eq.s32.totalorder %v392, 1
        %vm398 = vcmp.eq.s32.totalorder %v396, 1
        %v399 = vsel %vm397, %v383, 0.0
        %v400 = vsel %vm398, %v384, 0.0
        %v403 = vrot.slane %v399, 4
        %v404 = vrot.slane %v400, 4
        %407 = vst [vmem:[#allocation2 + $0x20] sm:$0xf0] %v403
        %408 = vst [vmem:[#allocation2 + $0x28] sm:$0xf0] %v404
        %409 = vrot.lane.b32.xlu0 %v243, 113
        %v410 = vpop.permute.xlu0 %409
        %411 = vrot.lane.b32.xlu0 %v245, 113
        %v412 = vpop.permute.xlu0 %411
        %vm413 = vcmp.lt.s32.totalorder %v252, 113
        %v414 = vsel %vm413, %v410, %v412
        %v415 = vsel %vm413, %v412, %v410
        %s416 = scalar_lea.vmem [#allocation9], 6
        %v417 = vld [vmem:[%s416] ss:$8 sm:$0x3]
        %vm418 = vcmp.gt.f32.partialorder %v417, 0.0
        %v419 = vsel %vm418, 1, 0
        %v420 = vlaneseq
        %v421 = vshrl.u32 %v420, 7
        %v422 = vsub.s32 0, %v421
        %v423 = vrot.slane %v419, %v422
        %v424 = vlaneseq
        %v425 = vshrl.u32 %v424, 7
        %v426 = vsub.s32 1, %v425
        %v427 = vrot.slane %v419, %v426
        %vm428 = vcmp.eq.s32.totalorder %v423, 1
        %vm429 = vcmp.eq.s32.totalorder %v427, 1
        %v430 = vsel %vm428, %v414, 0.0
        %v431 = vsel %vm429, %v415, 0.0
        %432 = vst [vmem:[#allocation2 + $0x30] sm:$0xf] %v430
        %433 = vst [vmem:[#allocation2 + $0x38] sm:$0xf] %v431
        %434 = vrot.lane.b32.xlu0 %v243, 112
        %v435 = vpop.permute.xlu0 %434
        %436 = vrot.lane.b32.xlu0 %v245, 112
        %v437 = vpop.permute.xlu0 %436
        %vm438 = vcmp.lt.s32.totalorder %v252, 112
        %v439 = vsel %vm438, %v435, %v437
        %v440 = vsel %vm438, %v437, %v435
        %s441 = scalar_lea.vmem [#allocation9], 7
        %v442 = vld [vmem:[%s441] ss:$8 sm:$0x3]
        %vm443 = vcmp.gt.f32.partialorder %v442, 0.0
        %v444 = vsel %vm443, 1, 0
        %v445 = vlaneseq
        %v446 = vshrl.u32 %v445, 7
        %v447 = vsub.s32 0, %v446
        %v448 = vrot.slane %v444, %v447
        %v449 = vlaneseq
        %v450 = vshrl.u32 %v449, 7
        %v451 = vsub.s32 1, %v450
        %v452 = vrot.slane %v444, %v451
        %vm453 = vcmp.eq.s32.totalorder %v448, 1
        %vm454 = vcmp.eq.s32.totalorder %v452, 1
        %v455 = vsel %vm453, %v439, 0.0
        %v456 = vsel %vm454, %v440, 0.0
        %v459 = vrot.slane %v455, 4
        %v460 = vrot.slane %v456, 4
        %463 = vst [vmem:[#allocation2 + $0x30] sm:$0xf0] %v459
        %464 = vst [vmem:[#allocation2 + $0x38] sm:$0xf0] %v460
        %465 = vrot.lane.b32.xlu0 %v243, 111
        %v466 = vpop.permute.xlu0 %465
        %467 = vrot.lane.b32.xlu0 %v245, 111
        %v468 = vpop.permute.xlu0 %467
        %vm469 = vcmp.lt.s32.totalorder %v252, 111
        %v470 = vsel %vm469, %v466, %v468
        %v471 = vsel %vm469, %v468, %v466
        %s472 = scalar_lea.vmem [#allocation9], 16
        %v473 = vld [vmem:[%s472] ss:$8 sm:$0x3]
        %vm474 = vcmp.gt.f32.partialorder %v473, 0.0
        %v475 = vsel %vm474, 1, 0
        %v476 = vlaneseq
        %v477 = vshrl.u32 %v476, 7
        %v478 = vsub.s32 0, %v477
        %v479 = vrot.slane %v475, %v478
        %v480 = vlaneseq
        %v481 = vshrl.u32 %v480, 7
        %v482 = vsub.s32 1, %v481
        %v483 = vrot.slane %v475, %v482
        %vm484 = vcmp.eq.s32.totalorder %v479, 1
        %vm485 = vcmp.eq.s32.totalorder %v483, 1
        %v486 = vsel %vm484, %v470, 0.0
        %v487 = vsel %vm485, %v471, 0.0
        %488 = vst [vmem:[#allocation2 + $0x40] sm:$0xf] %v486
        %489 = vst [vmem:[#allocation2 + $0x48] sm:$0xf] %v487
        %v490 = vld [vmem:[#allocation7] sm:$0xf]
        %v491 = vld [vmem:[#allocation2] sm:$0xff]
        %v492 = vld [vmem:[#allocation2 + $0x8] sm:$0xff]
        %v493 = vld [vmem:[#allocation2 + $0x10] sm:$0xff]
        %v494 = vld [vmem:[#allocation2 + $0x18] sm:$0xff]
        %v495 = vld [vmem:[#allocation2 + $0x20] sm:$0xff]
        %v496 = vld [vmem:[#allocation2 + $0x28] sm:$0xff]
        %v497 = vld [vmem:[#allocation2 + $0x30] sm:$0xff]
        %v498 = vld [vmem:[#allocation2 + $0x38] sm:$0xff]
        %v499 = vld [vmem:[#allocation2 + $0x40] sm:$0xf]
        %v500 = vld [vmem:[#allocation2 + $0x48] sm:$0xf]
        %vm501 = vcmask 293888
        %v503 = vsel %vm501, %v490, 0
        %vm505 = vcmask 1043456
        %v507 = vsel %vm505, %v499, 0
        %v510 = vsel %vm505, %v500, 0
        %512 = vmatprep.subr.mxu0 %v492
        %513 = vmatpush1.msra.mxu0 %v491
        %514 = vmatprep.subr.mxu0 %v494
        %515 = vmatpush1.msra.mxu0 %v493
        %516 = vmatprep.subr.mxu0 %v496
        %517 = vmatpush1.msra.mxu0 %v495
        %518 = vmatprep.subr.mxu0 %v498
        %519 = vmatpush1.msra.mxu0 %v497
        %520 = vmatprep.subr.mxu0 %v510
        %521 = vmatpush1.msra.mxu0 %v507
        %522 = vmatprep.subr.mxu0 0.0
        %523 = vmatpush1.msra.mxu0 0.0
        %524 = vmatprep.subr.mxu0 0.0
        %525 = vmatpush1.msra.mxu0 0.0
        %526 = vmatprep.subr.mxu0 0.0
        %527 = vmatpush1.msra.mxu0 0.0
        %528 = vmatprep.subr.mxu0 0.0
        %529 = vmatpush1.msra.mxu0 0.0
        %530 = vmatprep.subr.mxu0 0.0
        %531 = vmatpush1.msra.mxu0 0.0
        %532 = vmatprep.subr.mxu0 0.0
        %533 = vmatpush1.msra.mxu0 0.0
        %534 = vmatprep.subr.mxu0 0.0
        %535 = vmatpush1.msra.mxu0 0.0
        %536 = vmatprep.subr.mxu0 0.0
        %537 = vmatpush1.msra.mxu0 0.0
        %538 = vmatprep.subr.mxu0 0.0
        %539 = vmatpush1.msra.mxu0 0.0
        %540 = vmatprep.subr.mxu0 0.0
        %541 = vmatpush1.msra.mxu0 0.0
        %542 = vmatprep.subr.mxu0 0.0
        %543 = vmatpush1.msra.mxu0 0.0
        %544 = vmatprep.subr.mxu0 0.0
        %545 = vmatpush1.msra.mxu0 0.0
        %546 = vmatprep.subr.mxu0 0.0
        %547 = vmatpush1.msra.mxu0 0.0
        %548 = vmatprep.subr.mxu0 0.0
        %549 = vmatpush1.msra.mxu0 0.0
        %550 = vmatprep.subr.mxu0 0.0
        %551 = vmatpush1.msra.mxu0 0.0
        %552 = vmatprep.subr.mxu0 0.0
        %553 = vmatpush1.msra.mxu0 0.0
        %554 = vmatprep.subr.mxu0 0.0
        %555 = vmatpush1.msra.mxu0 0.0
        %556 = vmatprep.subr.mxu0 0.0
        %557 = vmatpush1.msra.mxu0 0.0
        %558 = vmatprep.subr.mxu0 0.0
        %559 = vmatpush1.msra.mxu0 0.0
        %560 = vmatprep.subr.mxu0 0.0
        %561 = vmatpush1.msra.mxu0 0.0
        %562 = vmatprep.subr.mxu0 0.0
        %563 = vmatpush1.msra.mxu0 0.0
        %564 = vmatprep.subr.mxu0 0.0
        %565 = vmatpush1.msra.mxu0 0.0
        %566 = vmatprep.subr.mxu0 0.0
        %567 = vmatpush1.msra.mxu0 0.0
        %568 = vmatprep.subr.mxu0 0.0
        %569 = vmatpush1.msra.mxu0 0.0
        %570 = vmatprep.subr.mxu0 0.0
        %571 = vmatpush1.msra.mxu0 0.0
        %572 = vmatprep.subr.mxu0 0.0
        %573 = vmatpush1.msra.mxu0 0.0
        %574 = vmatprep.subr.mxu0 0.0
        %575 = vmatpush1.msra.mxu0 0.0
        %576 = vmatprep.mubr.f32.mxu0 0.0
        %577 = vmatmul.mubr.f32.gmra.mrb[0].mxu0 %v503
        %v578 = vpop.f32.mrb[0].mxu0
        %v579 = vadd.f32 0.0, %v578
        %v580 = vpop.f32.mrb[0].mxu0
        %v581 = vadd.f32 0.0, %v580
        %582 = vdwg.mxu0
        %v583 = vlaneseq
        %v584 = vshrl.u32 %v583, 7
        %v585 = vsel %vm505, %v579, 0.0
        %v586 = vsel %vm505, %v581, 0.0
        %v587 = vadd.f32 %v585, %v586
        %588 = vadd.xlane.f32.xlu0 %v587
        %v589 = vpop.xlane.xlu0 %588
        %v590 = vmul.f32 %v589, 0.00390625
        %vm591 = vcmask 7168
        %v593 = vsel %vm591, 1.0, 0
        %v596 = vsel %vm591, %v590, 0
        %598 = vmatprep.subr.mxu0 0.0
        %599 = vmatpush1.xpose.msra.mxu0 %v596
        %600 = vmatprep.subr.mxu0 0.0
        %601 = vmatpush1.xpose.msra.mxu0 0.0
        %602 = vmatprep.subr.mxu0 0.0
        %603 = vmatpush1.xpose.msra.mxu0 0.0
        %604 = vmatprep.subr.mxu0 0.0
        %605 = vmatpush1.xpose.msra.mxu0 0.0
        %606 = vmatprep.subr.mxu0 0.0
        %607 = vmatpush1.xpose.msra.mxu0 0.0
        %608 = vmatprep.subr.mxu0 0.0
        %609 = vmatpush1.xpose.msra.mxu0 0.0
        %610 = vmatprep.subr.mxu0 0.0
        %611 = vmatpush1.xpose.msra.mxu0 0.0
        %612 = vmatprep.subr.mxu0 0.0
        %613 = vmatpush1.xpose.msra.mxu0 0.0
        %614 = vmatprep.subr.mxu0 0.0
        %615 = vmatpush1.xpose.msra.mxu0 0.0
        %616 = vmatprep.subr.mxu0 0.0
        %617 = vmatpush1.xpose.msra.mxu0 0.0
        %618 = vmatprep.subr.mxu0 0.0
        %619 = vmatpush1.xpose.msra.mxu0 0.0
        %620 = vmatprep.subr.mxu0 0.0
        %621 = vmatpush1.xpose.msra.mxu0 0.0
        %622 = vmatprep.subr.mxu0 0.0
        %623 = vmatpush1.xpose.msra.mxu0 0.0
        %624 = vmatprep.subr.mxu0 0.0
        %625 = vmatpush1.xpose.msra.mxu0 0.0
        %626 = vmatprep.subr.mxu0 0.0
        %627 = vmatpush1.xpose.msra.mxu0 0.0
        %628 = vmatprep.subr.mxu0 0.0
        %629 = vmatpush1.xpose.msra.mxu0 0.0
        %630 = vmatprep.subr.mxu0 0.0
        %631 = vmatpush1.xpose.msra.mxu0 0.0
        %632 = vmatprep.subr.mxu0 0.0
        %633 = vmatpush1.xpose.msra.mxu0 0.0
        %634 = vmatprep.subr.mxu0 0.0
        %635 = vmatpush1.xpose.msra.mxu0 0.0
        %636 = vmatprep.subr.mxu0 0.0
        %637 = vmatpush1.xpose.msra.mxu0 0.0
        %638 = vmatprep.subr.mxu0 0.0
        %639 = vmatpush1.xpose.msra.mxu0 0.0
        %640 = vmatprep.subr.mxu0 0.0
        %641 = vmatpush1.xpose.msra.mxu0 0.0
        %642 = vmatprep.subr.mxu0 0.0
        %643 = vmatpush1.xpose.msra.mxu0 0.0
        %644 = vmatprep.subr.mxu0 0.0
        %645 = vmatpush1.xpose.msra.mxu0 0.0
        %646 = vmatprep.subr.mxu0 0.0
        %647 = vmatpush1.xpose.msra.mxu0 0.0
        %648 = vmatprep.subr.mxu0 0.0
        %649 = vmatpush1.xpose.msra.mxu0 0.0
        %650 = vmatprep.subr.mxu0 0.0
        %651 = vmatpush1.xpose.msra.mxu0 0.0
        %652 = vmatprep.subr.mxu0 0.0
        %653 = vmatpush1.xpose.msra.mxu0 0.0
        %654 = vmatprep.subr.mxu0 0.0
        %655 = vmatpush1.xpose.msra.mxu0 0.0
        %656 = vmatprep.subr.mxu0 0.0
        %657 = vmatpush1.xpose.msra.mxu0 0.0
        %658 = vmatprep.subr.mxu0 0.0
        %659 = vmatpush1.xpose.msra.mxu0 0.0
        %660 = vmatprep.subr.mxu0 0.0
        %661 = vmatpush1.xpose.msra.mxu0 0.0
        %662 = vmatprep.mubr.f32.mxu0 0.0
        %663 = vmatmul.mubr.f32.gmra.mrb[0].mxu0 %v593
        %v664 = vpop.f32.mrb[0].mxu0
        %v665 = vadd.f32 0.0, %v664
        %v666 = vpop.f32.mrb[0].mxu0
        %667 = vdwg.mxu0
        %vm668 = vcmp.gt.f32.partialorder %v590, %v665
        %vm669 = vcmp.eq.f32.partialorder %v590, %v665
        %vm670 = vcmp.lt.s32.totalorder %v584, %v252
        %vm671 = vmand %vm669, %vm670
        %vm672 = vmor %vm668, %vm671
        %v673 = vsel %vm672, 1, 0
        %v674 = vcvt.s32.f32 %v673
        %vm675 = vcmask 27648
        %v676 = vsel %vm675, %v674, 0.0
        %v677 = vrot.slane %v676, 4
        %v678 = vadd.f32 %v676, %v677
        %v679 = vrot.slane %v678, 2
        %v680 = vadd.f32 %v678, %v679
        %v681 = vrot.slane %v680, 1
        %v682 = vadd.f32 %v680, %v681
        %v683 = vcvt.s32.f32 %v584
        %vm684 = vcmp.eq.f32.partialorder %v682, %v683
        %v685 = vsel %vm684, 1, 0
        %v686 = vcvt.s32.f32 %v685
        %vm687 = vcmask 31744
        %v689 = vsel %vm687, %v686, 0
        %v692 = vsel %vm505, %v579, 0
        %v695 = vsel %vm505, %v581, 0
        %697 = vmatprep.subr.mxu0 %v695
        %698 = vmatpush1.msra.mxu0 %v692
        %699 = vmatprep.subr.mxu0 0.0
        %700 = vmatpush1.msra.mxu0 0.0
        %701 = vmatprep.subr.mxu0 0.0
        %702 = vmatpush1.msra.mxu0 0.0
        %703 = vmatprep.subr.mxu0 0.0
        %704 = vmatpush1.msra.mxu0 0.0
        %705 = vmatprep.subr.mxu0 0.0
        %706 = vmatpush1.msra.mxu0 0.0
        %707 = vmatprep.subr.mxu0 0.0
        %708 = vmatpush1.msra.mxu0 0.0
        %709 = vmatprep.subr.mxu0 0.0
        %710 = vmatpush1.msra.mxu0 0.0
        %711 = vmatprep.subr.mxu0 0.0
        %712 = vmatpush1.msra.mxu0 0.0
        %713 = vmatprep.subr.mxu0 0.0
        %714 = vmatpush1.msra.mxu0 0.0
        %715 = vmatprep.subr.mxu0 0.0
        %716 = vmatpush1.msra.mxu0 0.0
        %717 = vmatprep.subr.mxu0 0.0
        %718 = vmatpush1.msra.mxu0 0.0
        %719 = vmatprep.subr.mxu0 0.0
        %720 = vmatpush1.msra.mxu0 0.0
        %721 = vmatprep.subr.mxu0 0.0
        %722 = vmatpush1.msra.mxu0 0.0
        %723 = vmatprep.subr.mxu0 0.0
        %724 = vmatpush1.msra.mxu0 0.0
        %725 = vmatprep.subr.mxu0 0.0
        %726 = vmatpush1.msra.mxu0 0.0
        %727 = vmatprep.subr.mxu0 0.0
        %728 = vmatpush1.msra.mxu0 0.0
        %729 = vmatprep.subr.mxu0 0.0
        %730 = vmatpush1.msra.mxu0 0.0
        %731 = vmatprep.subr.mxu0 0.0
        %732 = vmatpush1.msra.mxu0 0.0
        %733 = vmatprep.subr.mxu0 0.0
        %734 = vmatpush1.msra.mxu0 0.0
        %735 = vmatprep.subr.mxu0 0.0
        %736 = vmatpush1.msra.mxu0 0.0
        %737 = vmatprep.subr.mxu0 0.0
        %738 = vmatpush1.msra.mxu0 0.0
        %739 = vmatprep.subr.mxu0 0.0
        %740 = vmatpush1.msra.mxu0 0.0
        %741 = vmatprep.subr.mxu0 0.0
        %742 = vmatpush1.msra.mxu0 0.0
        %743 = vmatprep.subr.mxu0 0.0
        %744 = vmatpush1.msra.mxu0 0.0
        %745 = vmatprep.subr.mxu0 0.0
        %746 = vmatpush1.msra.mxu0 0.0
        %747 = vmatprep.subr.mxu0 0.0
        %748 = vmatpush1.msra.mxu0 0.0
        %749 = vmatprep.subr.mxu0 0.0
        %750 = vmatpush1.msra.mxu0 0.0
        %751 = vmatprep.subr.mxu0 0.0
        %752 = vmatpush1.msra.mxu0 0.0
        %753 = vmatprep.subr.mxu0 0.0
        %754 = vmatpush1.msra.mxu0 0.0
        %755 = vmatprep.subr.mxu0 0.0
        %756 = vmatpush1.msra.mxu0 0.0
        %757 = vmatprep.subr.mxu0 0.0
        %758 = vmatpush1.msra.mxu0 0.0
        %759 = vmatprep.subr.mxu0 0.0
        %760 = vmatpush1.msra.mxu0 0.0
        %761 = vmatprep.mubr.f32.mxu0 0.0
        %762 = vmatmul.mubr.f32.gmra.mrb[0].mxu0 %v689
        %v763 = vpop.f32.mrb[0].mxu0
        %v764 = vadd.f32 0.0, %v763
        %v765 = vpop.f32.mrb[0].mxu0
        %v766 = vadd.f32 0.0, %v765
        %767 = vdwg.mxu0
        %v770 = vcombine.low %v764, %v766
        %772 = vst [vmem:[#allocation3] sm:$0xff] %v770
        %v773 = vld [vmem:[#allocation3] sm:$0xff]
        %v775 = vcombine.high %v773, %v773
        %777 = vrot.lane.b32.xlu0 %v773, 17
        %v778 = vpop.permute.xlu0 %777
        %779 = vrot.lane.b32.xlu0 %v775, 17
        %v780 = vpop.permute.xlu0 %779
        %v781 = vsel %vm253, %v778, %v780
        %v782 = vsel %vm253, %v780, %v778
        %v783 = vld [vmem:[#allocation9] ss:$8 sm:$0x3]
        %vm784 = vcmp.gt.f32.partialorder %v783, 0.0
        %v785 = vsel %vm784, 1, 0
        %v786 = vlaneseq
        %v787 = vshrl.u32 %v786, 7
        %v788 = vsub.s32 0, %v787
        %v789 = vrot.slane %v785, %v788
        %v790 = vlaneseq
        %v791 = vshrl.u32 %v790, 7
        %v792 = vsub.s32 1, %v791
        %v793 = vrot.slane %v785, %v792
        %vm794 = vcmp.eq.s32.totalorder %v789, 1
        %vm795 = vcmp.eq.s32.totalorder %v793, 1
        %v796 = vsel %vm794, %v782, 0.0
        %v797 = vsel %vm795, %v781, 0.0
        %798 = vst [vmem:[#allocation2] sm:$0xf] %v796
        %799 = vst [vmem:[#allocation2 + $0x8] sm:$0xf] %v797
        %800 = vrot.lane.b32.xlu0 %v773, 16
        %v801 = vpop.permute.xlu0 %800
        %802 = vrot.lane.b32.xlu0 %v775, 16
        %v803 = vpop.permute.xlu0 %802
        %v804 = vsel %vm277, %v801, %v803
        %v805 = vsel %vm277, %v803, %v801
        %v806 = vld [vmem:[%s280] ss:$8 sm:$0x3]
        %vm807 = vcmp.gt.f32.partialorder %v806, 0.0
        %v808 = vsel %vm807, 1, 0
        %v809 = vlaneseq
        %v810 = vshrl.u32 %v809, 7
        %v811 = vsub.s32 0, %v810
        %v812 = vrot.slane %v808, %v811
        %v813 = vlaneseq
        %v814 = vshrl.u32 %v813, 7
        %v815 = vsub.s32 1, %v814
        %v816 = vrot.slane %v808, %v815
        %vm817 = vcmp.eq.s32.totalorder %v812, 1
        %vm818 = vcmp.eq.s32.totalorder %v816, 1
        %v819 = vsel %vm817, %v805, 0.0
        %v820 = vsel %vm818, %v804, 0.0
        %v823 = vrot.slane %v819, 4
        %v824 = vrot.slane %v820, 4
        %827 = vst [vmem:[#allocation2] sm:$0xf0] %v823
        %828 = vst [vmem:[#allocation2 + $0x8] sm:$0xf0] %v824
        %829 = vrot.lane.b32.xlu0 %v773, 15
        %v830 = vpop.permute.xlu0 %829
        %831 = vrot.lane.b32.xlu0 %v775, 15
        %v832 = vpop.permute.xlu0 %831
        %v833 = vsel %vm308, %v830, %v832
        %v834 = vsel %vm308, %v832, %v830
        %v835 = vld [vmem:[%s311] ss:$8 sm:$0x3]
        %vm836 = vcmp.gt.f32.partialorder %v835, 0.0
        %v837 = vsel %vm836, 1, 0
        %v838 = vlaneseq
        %v839 = vshrl.u32 %v838, 7
        %v840 = vsub.s32 0, %v839
        %v841 = vrot.slane %v837, %v840
        %v842 = vlaneseq
        %v843 = vshrl.u32 %v842, 7
        %v844 = vsub.s32 1, %v843
        %v845 = vrot.slane %v837, %v844
        %vm846 = vcmp.eq.s32.totalorder %v841, 1
        %vm847 = vcmp.eq.s32.totalorder %v845, 1
        %v848 = vsel %vm846, %v834, 0.0
        %v849 = vsel %vm847, %v833, 0.0
        %850 = vst [vmem:[#allocation2 + $0x10] sm:$0xf] %v848
        %851 = vst [vmem:[#allocation2 + $0x18] sm:$0xf] %v849
        %852 = vrot.lane.b32.xlu0 %v773, 1
        %v853 = vpop.permute.xlu0 %852
        %854 = vrot.lane.b32.xlu0 %v775, 1
        %v855 = vpop.permute.xlu0 %854
        %v856 = vsel %vm333, %v853, %v855
        %v857 = vsel %vm333, %v855, %v853
        %v858 = vld [vmem:[%s336] ss:$8 sm:$0x3]
        %vm859 = vcmp.gt.f32.partialorder %v858, 0.0
        %v860 = vsel %vm859, 1, 0
        %v861 = vlaneseq
        %v862 = vshrl.u32 %v861, 7
        %v863 = vsub.s32 0, %v862
        %v864 = vrot.slane %v860, %v863
        %v865 = vlaneseq
        %v866 = vshrl.u32 %v865, 7
        %v867 = vsub.s32 1, %v866
        %v868 = vrot.slane %v860, %v867
        %vm869 = vcmp.eq.s32.totalorder %v864, 1
        %vm870 = vcmp.eq.s32.totalorder %v868, 1
        %v871 = vsel %vm869, %v857, 0.0
        %v872 = vsel %vm870, %v856, 0.0
        %v875 = vrot.slane %v871, 4
        %v876 = vrot.slane %v872, 4
        %879 = vst [vmem:[#allocation2 + $0x10] sm:$0xf0] %v875
        %880 = vst [vmem:[#allocation2 + $0x18] sm:$0xf0] %v876
        %v881 = vld [vmem:[%s360] ss:$8 sm:$0x3]
        %vm882 = vcmp.gt.f32.partialorder %v881, 0.0
        %v883 = vsel %vm882, 1, 0
        %v884 = vlaneseq
        %v885 = vshrl.u32 %v884, 7
        %v886 = vsub.s32 0, %v885
        %v887 = vrot.slane %v883, %v886
        %v888 = vlaneseq
        %v889 = vshrl.u32 %v888, 7
        %v890 = vsub.s32 1, %v889
        %v891 = vrot.slane %v883, %v890
        %vm892 = vcmp.eq.s32.totalorder %v887, 1
        %vm893 = vcmp.eq.s32.totalorder %v891, 1
        %v894 = vsel %vm892, %v773, 0.0
        %v895 = vsel %vm893, %v775, 0.0
        %896 = vst [vmem:[#allocation2 + $0x20] sm:$0xf] %v894
        %897 = vst [vmem:[#allocation2 + $0x28] sm:$0xf] %v895
        %898 = vrot.lane.b32.xlu0 %v773, 127
        %v899 = vpop.permute.xlu0 %898
        %900 = vrot.lane.b32.xlu0 %v775, 127
        %v901 = vpop.permute.xlu0 %900
        %v902 = vsel %vm382, %v899, %v901
        %v903 = vsel %vm382, %v901, %v899
        %v904 = vld [vmem:[%s385] ss:$8 sm:$0x3]
        %vm905 = vcmp.gt.f32.partialorder %v904, 0.0
        %v906 = vsel %vm905, 1, 0
        %v907 = vlaneseq
        %v908 = vshrl.u32 %v907, 7
        %v909 = vsub.s32 0, %v908
        %v910 = vrot.slane %v906, %v909
        %v911 = vlaneseq
        %v912 = vshrl.u32 %v911, 7
        %v913 = vsub.s32 1, %v912
        %v914 = vrot.slane %v906, %v913
        %vm915 = vcmp.eq.s32.totalorder %v910, 1
        %vm916 = vcmp.eq.s32.totalorder %v914, 1
        %v917 = vsel %vm915, %v902, 0.0
        %v918 = vsel %vm916, %v903, 0.0
        %v921 = vrot.slane %v917, 4
        %v922 = vrot.slane %v918, 4
        %925 = vst [vmem:[#allocation2 + $0x20] sm:$0xf0] %v921
        %926 = vst [vmem:[#allocation2 + $0x28] sm:$0xf0] %v922
        %927 = vrot.lane.b32.xlu0 %v773, 113
        %v928 = vpop.permute.xlu0 %927
        %929 = vrot.lane.b32.xlu0 %v775, 113
        %v930 = vpop.permute.xlu0 %929
        %v931 = vsel %vm413, %v928, %v930
        %v932 = vsel %vm413, %v930, %v928
        %v933 = vld [vmem:[%s416] ss:$8 sm:$0x3]
        %vm934 = vcmp.gt.f32.partialorder %v933, 0.0
        %v935 = vsel %vm934, 1, 0
        %v936 = vlaneseq
        %v937 = vshrl.u32 %v936, 7
        %v938 = vsub.s32 0, %v937
        %v939 = vrot.slane %v935, %v938
        %v940 = vlaneseq
        %v941 = vshrl.u32 %v940, 7
        %v942 = vsub.s32 1, %v941
        %v943 = vrot.slane %v935, %v942
        %vm944 = vcmp.eq.s32.totalorder %v939, 1
        %vm945 = vcmp.eq.s32.totalorder %v943, 1
        %v946 = vsel %vm944, %v931, 0.0
        %v947 = vsel %vm945, %v932, 0.0
        %948 = vst [vmem:[#allocation2 + $0x30] sm:$0xf] %v946
        %949 = vst [vmem:[#allocation2 + $0x38] sm:$0xf] %v947
        %950 = vrot.lane.b32.xlu0 %v773, 112
        %v951 = vpop.permute.xlu0 %950
        %952 = vrot.lane.b32.xlu0 %v775, 112
        %v953 = vpop.permute.xlu0 %952
        %v954 = vsel %vm438, %v951, %v953
        %v955 = vsel %vm438, %v953, %v951
        %v956 = vld [vmem:[%s441] ss:$8 sm:$0x3]
        %vm957 = vcmp.gt.f32.partialorder %v956, 0.0
        %v958 = vsel %vm957, 1, 0
        %v959 = vlaneseq
        %v960 = vshrl.u32 %v959, 7
        %v961 = vsub.s32 0, %v960
        %v962 = vrot.slane %v958, %v961
        %v963 = vlaneseq
        %v964 = vshrl.u32 %v963, 7
        %v965 = vsub.s32 1, %v964
        %v966 = vrot.slane %v958, %v965
        %vm967 = vcmp.eq.s32.totalorder %v962, 1
        %vm968 = vcmp.eq.s32.totalorder %v966, 1
        %v969 = vsel %vm967, %v954, 0.0
        %v970 = vsel %vm968, %v955, 0.0
        %v973 = vrot.slane %v969, 4
        %v974 = vrot.slane %v970, 4
        %977 = vst [vmem:[#allocation2 + $0x30] sm:$0xf0] %v973
        %978 = vst [vmem:[#allocation2 + $0x38] sm:$0xf0] %v974
        %979 = vrot.lane.b32.xlu0 %v773, 111
        %v980 = vpop.permute.xlu0 %979
        %981 = vrot.lane.b32.xlu0 %v775, 111
        %v982 = vpop.permute.xlu0 %981
        %v983 = vsel %vm469, %v980, %v982
        %v984 = vsel %vm469, %v982, %v980
        %v985 = vld [vmem:[%s472] ss:$8 sm:$0x3]
        %vm986 = vcmp.gt.f32.partialorder %v985, 0.0
        %v987 = vsel %vm986, 1, 0
        %v988 = vlaneseq
        %v989 = vshrl.u32 %v988, 7
        %v990 = vsub.s32 0, %v989
        %v991 = vrot.slane %v987, %v990
        %v992 = vlaneseq
        %v993 = vshrl.u32 %v992, 7
        %v994 = vsub.s32 1, %v993
        %v995 = vrot.slane %v987, %v994
        %vm996 = vcmp.eq.s32.totalorder %v991, 1
        %vm997 = vcmp.eq.s32.totalorder %v995, 1
        %v998 = vsel %vm996, %v983, 0.0
        %v999 = vsel %vm997, %v984, 0.0
        %1000 = vst [vmem:[#allocation2 + $0x40] sm:$0xf] %v998
        %1001 = vst [vmem:[#allocation2 + $0x48] sm:$0xf] %v999
        %v1002 = vld [vmem:[%s2] sm:$0xf]
        %v1003 = vld [vmem:[#allocation2] sm:$0xff]
        %v1004 = vld [vmem:[#allocation2 + $0x8] sm:$0xff]
        %v1005 = vld [vmem:[#allocation2 + $0x10] sm:$0xff]
        %v1006 = vld [vmem:[#allocation2 + $0x18] sm:$0xff]
        %v1007 = vld [vmem:[#allocation2 + $0x20] sm:$0xff]
        %v1008 = vld [vmem:[#allocation2 + $0x28] sm:$0xff]
        %v1009 = vld [vmem:[#allocation2 + $0x30] sm:$0xff]
        %v1010 = vld [vmem:[#allocation2 + $0x38] sm:$0xff]
        %v1011 = vld [vmem:[#allocation2 + $0x40] sm:$0xf]
        %v1012 = vld [vmem:[#allocation2 + $0x48] sm:$0xf]
        %v1014 = vsel %vm501, %v1002, 0
        %v1017 = vsel %vm505, %v1011, 0
        %v1020 = vsel %vm505, %v1012, 0
        %1022 = vmatprep.subr.mxu0 %v1004
        %1023 = vmatpush1.msra.mxu0 %v1003
        %1024 = vmatprep.subr.mxu0 %v1006
        %1025 = vmatpush1.msra.mxu0 %v1005
        %1026 = vmatprep.subr.mxu0 %v1008
        %1027 = vmatpush1.msra.mxu0 %v1007
        %1028 = vmatprep.subr.mxu0 %v1010
        %1029 = vmatpush1.msra.mxu0 %v1009
        %1030 = vmatprep.subr.mxu0 %v1020
        %1031 = vmatpush1.msra.mxu0 %v1017
        %1032 = vmatprep.subr.mxu0 0.0
        %1033 = vmatpush1.msra.mxu0 0.0
        %1034 = vmatprep.subr.mxu0 0.0
        %1035 = vmatpush1.msra.mxu0 0.0
        %1036 = vmatprep.subr.mxu0 0.0
        %1037 = vmatpush1.msra.mxu0 0.0
        %1038 = vmatprep.subr.mxu0 0.0
        %1039 = vmatpush1.msra.mxu0 0.0
        %1040 = vmatprep.subr.mxu0 0.0
        %1041 = vmatpush1.msra.mxu0 0.0
        %1042 = vmatprep.subr.mxu0 0.0
        %1043 = vmatpush1.msra.mxu0 0.0
        %1044 = vmatprep.subr.mxu0 0.0
        %1045 = vmatpush1.msra.mxu0 0.0
        %1046 = vmatprep.subr.mxu0 0.0
        %1047 = vmatpush1.msra.mxu0 0.0
        %1048 = vmatprep.subr.mxu0 0.0
        %1049 = vmatpush1.msra.mxu0 0.0
        %1050 = vmatprep.subr.mxu0 0.0
        %1051 = vmatpush1.msra.mxu0 0.0
        %1052 = vmatprep.subr.mxu0 0.0
        %1053 = vmatpush1.msra.mxu0 0.0
        %1054 = vmatprep.subr.mxu0 0.0
        %1055 = vmatpush1.msra.mxu0 0.0
        %1056 = vmatprep.subr.mxu0 0.0
        %1057 = vmatpush1.msra.mxu0 0.0
        %1058 = vmatprep.subr.mxu0 0.0
        %1059 = vmatpush1.msra.mxu0 0.0
        %1060 = vmatprep.subr.mxu0 0.0
        %1061 = vmatpush1.msra.mxu0 0.0
        %1062 = vmatprep.subr.mxu0 0.0
        %1063 = vmatpush1.msra.mxu0 0.0
        %1064 = vmatprep.subr.mxu0 0.0
        %1065 = vmatpush1.msra.mxu0 0.0
        %1066 = vmatprep.subr.mxu0 0.0
        %1067 = vmatpush1.msra.mxu0 0.0
        %1068 = vmatprep.subr.mxu0 0.0
        %1069 = vmatpush1.msra.mxu0 0.0
        %1070 = vmatprep.subr.mxu0 0.0
        %1071 = vmatpush1.msra.mxu0 0.0
        %1072 = vmatprep.subr.mxu0 0.0
        %1073 = vmatpush1.msra.mxu0 0.0
        %1074 = vmatprep.subr.mxu0 0.0
        %1075 = vmatpush1.msra.mxu0 0.0
        %1076 = vmatprep.subr.mxu0 0.0
        %1077 = vmatpush1.msra.mxu0 0.0
        %1078 = vmatprep.subr.mxu0 0.0
        %1079 = vmatpush1.msra.mxu0 0.0
        %1080 = vmatprep.subr.mxu0 0.0
        %1081 = vmatpush1.msra.mxu0 0.0
        %1082 = vmatprep.subr.mxu0 0.0
        %1083 = vmatpush1.msra.mxu0 0.0
        %1084 = vmatprep.subr.mxu0 0.0
        %1085 = vmatpush1.msra.mxu0 0.0
        %1086 = vmatprep.mubr.f32.mxu0 0.0
        %1087 = vmatmul.mubr.f32.gmra.mrb[0].mxu0 %v1014
        %v1088 = vpop.f32.mrb[0].mxu0
        %v1089 = vadd.f32 0.0, %v1088
        %v1090 = vpop.f32.mrb[0].mxu0
        %v1091 = vadd.f32 0.0, %v1090
        %1092 = vdwg.mxu0
        %v1095 = vcombine.low %v1089, %v1091
        %1097 = vst [vmem:[%s240] sm:$0xff] %v1095
        %s1098 = sand.u32 %s119, 1
        %s1099 = scalar_lea.sflag [#allocation6], %s1098
        %s1100 = sand.u32 %s119, 1
        %s1101 = smul.addr %s1100, 8
        %s1102 = scalar_lea.vmem [#allocation10], %s1101
        // Predicated region
        $region49: #{tpu_custom_call.1} parent=35 // pred_check
          %p1103 = pneg %p129
        $region50: #{tpu_custom_call.1} parent=35 // pred_check_branch
          %1105 = sbr.rel (%p1103) target = $region52
        $region51: #{tpu_custom_call.1} parent=35 // pred_region
          %s1106 = smul.u32 2, %s22
          %s1108 = ssub.s32 128, 128
          %1109 = vsyncadd %s1099, %s1108
          %s1110 = smul.addr %s1106, 64
          %s1111 = scalar_lea.hbm %s4, %s1110
          %s1113 = sshll.u32 %s1102, 4
          %s1114 = int_to_ptr.vmem [resolvable:$true] %s1113
          %1116 = dma.vmem_to_hbm [thread:$0]  %s1114, 128, %s1111, %s1099
        $region52: #{tpu_custom_call.1} parent=35 // pred_fallthru
          _
      $region36: #{tpu_custom_call.1} parent=5 // pred_fallthru
        _
      %p1117 = scmp.le.s32.totalorder 2, %s17
      // Predicated region
      $region53: #{tpu_custom_call.1} parent=5 // pred_check
        %p1118 = pneg %p1117
      $region54: #{tpu_custom_call.1} parent=5 // pred_check_branch
        %1120 = sbr.rel (%p1118) target = $region56
      $region55: #{tpu_custom_call.1} parent=5 // pred_region
        %s1121 = ssub.s32 %s17, 2
        // Predicated region
        $region57: #{tpu_custom_call.1} parent=55 // pred_check
          %p1122 = pneg %p135
        $region58: #{tpu_custom_call.1} parent=55 // pred_check_branch
          %1124 = sbr.rel (%p1122) target = $region60
        $region59: #{tpu_custom_call.1} parent=55 // pred_region
          %s1125 = sand.u32 %s120, 1
          %s1126 = scalar_lea.sflag [#allocation6], %s1125
          %s1127 = sand.u32 %s120, 1
          %s1128 = smul.addr %s1127, 8
          %s1129 = scalar_lea.vmem [#allocation10], %s1128
          %1130 = dma.done %s1126, 128
        $region60: #{tpu_custom_call.1} parent=55 // pred_fallthru
          _
      $region56: #{tpu_custom_call.1} parent=5 // pred_fallthru
        _
    $region6: #{tpu_custom_call.1} parent=1 // loop_footer
      %s21 = sadd.s32 1, %s17
    $region7: #{tpu_custom_call.1} parent=1 // loop_footer_branch
      %16 = sbr.rel target = $region3
    $region8: #{tpu_custom_call.1} parent=1 // loop_exit
      _
    %1131 = vsyncpa [#allocation5], 1
    %s1132 = scalar_lea.sflag [#allocation5], 1
    %1133 = vsyncpa %s1132, 1
    %1134 = vsyncpa [#allocation8], 1
    %1135 = vsyncpa [#allocation6], 1
    %s1136 = scalar_lea.sflag [#allocation6], 1
    %1137 = vsyncpa %s1136, 1

</llo_original>
